<compile_context>
chip_gen: v6e
topology: v6e:2x2x1
jax: 0.10.0
libtpu: 0.0.40
codegen_flags: <defaults>
</compile_context>

<pallas_src>
import math

import jax
import jax.numpy as jnp
from jax.experimental import pallas as pl
from jax.experimental.pallas import tpu as pltpu


def _round_up(x, m):
    return ((x + m - 1) // m) * m


def _pad_cols(a, k_target):
    k = a.shape[-1]
    if k == k_target:
        return a
    return jnp.pad(a, ((0, 0), (0, k_target - k)))


# ----------------------------- Pallas kernel ------------------------------ #
def _matmul_bias_relu_kernel(scale_ref, x_ref, w_ref, b_ref, o_ref):
    # o = relu((x @ w) * scale + b); x/w are bf16 tiles, accumulation in f32.
    acc = jnp.dot(x_ref[...], w_ref[...], preferred_element_type=jnp.float32)
    acc = acc * scale_ref[0] + b_ref[...]          # scale the small (TM, N) acc
    o_ref[...] = jnp.maximum(acc, 0.0).astype(o_ref.dtype)


def matmul_bias_relu(x, w, b, scale, *, out_dtype=jnp.bfloat16, tm=512):
    """relu((x @ w) * scale + b), 1-D grid over rows of x (double-buffered)."""
    M, K = x.shape
    Kw, N = w.shape
    assert K == Kw, (K, Kw)
    assert K % 128 == 0, K                          # lane-aligned contraction dim

    # Tile rows: use TM=512 when there is that much work, otherwise one block
    # covering all (sublane-rounded) rows.  Either way the block shape is legal:
    # a multiple of (8/16) or equal to the full (padded) dim.
    tm_eff = min(tm, _round_up(M, 8))
    m_pad = _round_up(M, tm_eff)
    if m_pad != M:
        x = jnp.pad(x, ((0, m_pad - M), (0, 0)))    # zero rows, sliced off below
    grid = (m_pad // tm_eff,)

    scale_arr = jnp.asarray(scale, jnp.float32).reshape(1)
    out = pl.pallas_call(
        _matmul_bias_relu_kernel,
        out_shape=jax.ShapeDtypeStruct((m_pad, N), out_dtype),
        grid=grid,
        in_specs=[
            pl.BlockSpec(memory_space=pltpu.MemorySpace.SMEM),   # scale (1,)
            pl.BlockSpec((tm_eff, K), lambda i: (i, 0)),         # x tile (stream)
            pl.BlockSpec((K, N), lambda i: (0, 0)),              # w (resident)
            pl.BlockSpec((1, N), lambda i: (0, 0)),              # bias (resident)
        ],
        out_specs=pl.BlockSpec((tm_eff, N), lambda i: (i, 0)),
        compiler_params=pltpu.CompilerParams(
            dimension_semantics=("parallel",),      # megacore-shard M tiles
            vmem_limit_bytes=32 * 1024 * 1024,      # safe on v5e/v6e/v7x
        ),
    )(scale_arr, x, w, b.reshape(1, N))
    return out[:M] if m_pad != M else out


# ------------------------------ conv as GEMM ------------------------------ #
def _im2col(x, kh, kw, stride):
    # x: (B, H, W, C) -> (B*OH*OW, KH*KW*C); patch element order is (kh, kw, c).
    B, H, W, C = x.shape
    oh = (H - kh) // stride + 1
    ow = (W - kw) // stride + 1
    cols = []
    for i in range(kh):
        for j in range(kw):
            cols.append(
                x[:, i:i + stride * (oh - 1) + 1:stride,
                     j:j + stride * (ow - 1) + 1:stride, :])
    patches = jnp.concatenate(cols, axis=-1)          # (B, OH, OW, KH*KW*C)
    return patches.reshape(B * oh * ow, kh * kw * C), oh, ow


def conv2d_relu(x_nhwc, w_mat, b, kh, kw, stride, scale=1.0,
                out_dtype=jnp.bfloat16):
    # w_mat: (round_up(kh*kw*cin, 128), cout) bf16, rows in (kh, kw, cin) order
    # (zero rows past kh*kw*cin match the zero-padded patch columns).
    patches, oh, ow = _im2col(x_nhwc, kh, kw, stride)
    patches = _pad_cols(patches, w_mat.shape[0])
    out = matmul_bias_relu(patches, w_mat, b, scale, out_dtype=out_dtype)
    return out.reshape(x_nhwc.shape[0], oh, ow, w_mat.shape[1])


# ----------------------------- module wrapper ------------------------------ #
class CNNFeatureExtractorPallas:
    """Pallas re-implementation of CNNFeatureExtractor.forward."""

    def __init__(self, obs_shape, output_features=256, *, key):
        if len(obs_shape) != 3:
            raise ValueError(f"Expected obs_shape in (C, H, W) format, got {obs_shape}")
        # Same channel-layout heuristic as the PyTorch module.
        if obs_shape[0] not in (1, 3, 4) and obs_shape[-1] in (1, 3, 4):
            h, w, c = obs_shape
        else:
            c, h, w = obs_shape
        self.c, self.h, self.w = c, h, w
        self.output_features = output_features

        # Spatial sizes after each conv (same arithmetic as torch dummy pass).
        h1, w1 = (h - 8) // 4 + 1, (w - 8) // 4 + 1
        h2, w2 = (h1 - 4) // 2 + 1, (w1 - 4) // 2 + 1
        h3, w3 = (h2 - 3) // 1 + 1, (w2 - 3) // 1 + 1
        conv_out_size = 64 * h3 * w3

        # Deterministic synthetic init (Kaiming-uniform-style bounds like torch),
        # stored pre-reshaped, K-padded to a multiple of 128, and cast to bf16.
        def conv_init(k, kh, kw, cin, cout):
            bound = 1.0 / math.sqrt(kh * kw * cin)
            kw_, kb_ = jax.random.split(k)
            W = jax.random.uniform(kw_, (kh, kw, cin, cout), jnp.float32, -bound, bound)
            b = jax.random.uniform(kb_, (cout,), jnp.float32, -bound, bound)
            kdim = kh * kw * cin
            kpad = _round_up(kdim, 128)
            w_mat = jnp.pad(W.reshape(kdim, cout), ((0, kpad - kdim), (0, 0)))
            return w_mat.astype(jnp.bfloat16), b

        k1, k2, k3, k4 = jax.random.split(key, 4)
        self.W1m, self.b1 = conv_init(k1, 8, 8, c, 32)
        self.W2m, self.b2 = conv_init(k2, 4, 4, 32, 64)
        self.W3m, self.b3 = conv_init(k3, 3, 3, 64, 64)

        # FC: generated with rows in torch's (C,H,W)-major flatten order, then
        # permuted ONCE to (H,W,C)-major so the NHWC conv3 output can be
        # flattened directly (no per-call transpose).
        bound = 1.0 / math.sqrt(conv_out_size)
        kwf, kbf = jax.random.split(k4)
        wfc_chw = jax.random.uniform(kwf, (conv_out_size, output_features),
                                     jnp.float32, -bound, bound)
        perm = jnp.transpose(jnp.arange(conv_out_size).reshape(64, h3, w3),
                             (1, 2, 0)).reshape(-1)
        wfc_hwc = wfc_chw[perm]
        kfp = _round_up(conv_out_size, 128)
        self.Wfcm = jnp.pad(wfc_hwc, ((0, kfp - conv_out_size), (0, 0))
                            ).astype(jnp.bfloat16)
        self.bfc = jax.random.uniform(kbf, (output_features,), jnp.float32,
                                      -bound, bound)

    def __call__(self, obs):
        if obs.dtype != jnp.float32:
            obs = obs.astype(jnp.float32)
        # Data-dependent "/255 if max > 1.1" branch -> traced scale folded into
        # the first kernel's accumulator (patches are linear in obs).
        # TODO(synk): full-tensor max is an extra XLA read pass; kept for exact
        # parity with the PyTorch semantics.
        scale = jnp.where(jnp.max(obs) > 1.1,
                          jnp.float32(1.0 / 255.0), jnp.float32(1.0))
        if obs.ndim == 3:
            obs = obs[None]
        if obs.shape[1] != self.c and obs.shape[-1] == self.c:
            obs = jnp.transpose(obs, (0, 3, 1, 2))          # NHWC -> NCHW
        elif obs.shape[1] != self.c:
            raise ValueError(
                f"Input observation channel dimension ({obs.shape[1]}) does not "
                f"match CNN input channels ({self.c}). Obs shape: {obs.shape}")

        # NCHW -> NHWC, bf16 for the MXU / halved HBM traffic.
        x = jnp.transpose(obs, (0, 2, 3, 1)).astype(jnp.bfloat16)
        x = conv2d_relu(x, self.W1m, self.b1, 8, 8, 4, scale=scale)
        x = conv2d_relu(x, self.W2m, self.b2, 4, 4, 2)
        x = conv2d_relu(x, self.W3m, self.b3, 3, 3, 1)
        # NHWC flatten feeds the HWC-permuted FC weight directly (no transpose).
        feats = x.reshape(x.shape[0], -1)
        feats = _pad_cols(feats, self.Wfcm.shape[0])
        return matmul_bias_relu(feats, self.Wfcm, self.bfc, 1.0,
                                out_dtype=jnp.float32)


if __name__ == "__main__":
    key = jax.random.PRNGKey(0)
    kp, kx = jax.random.split(key)

    # Small but valid shapes for the conv stack (H=W=36 -> 8 -> 3 -> 1).
    obs_shape = (4, 36, 36)          # (C, H, W)
    model = CNNFeatureExtractorPallas(obs_shape, output_features=256, key=kp)
    fwd = jax.jit(lambda o: model(o))

    # Pixel-valued input in [0, 255] to exercise the /255 normalization path.
    obs = jax.random.uniform(kx, (2,) + obs_shape, jnp.float32, 0.0, 255.0)
    out = jax.block_until_ready(fwd(obs))
    assert out.shape == (2, 256), out.shape
    assert out.dtype == jnp.float32, out.dtype

    # Larger (still small) batch exercises multi-tile grids and M padding.
    obs16 = jax.random.uniform(kx, (16,) + obs_shape, jnp.float32, 0.0, 255.0)
    out16 = jax.block_until_ready(fwd(obs16))
    assert out16.shape == (16, 256), out16.shape

    print("KERNEL_OK")
</pallas_src>

<mosaic_0001>
module attributes {stable_mosaic.version = 11 : i64} {
  func.func @_matmul_bias_relu_kernel(%arg0: i32, %arg1: memref<1xf32, #tpu.memory_space<smem>>, %arg2: memref<128x256xbf16, #tpu.memory_space<vmem>>, %arg3: memref<256x32xbf16, #tpu.memory_space<vmem>>, %arg4: memref<1x32xf32, #tpu.memory_space<vmem>>, %arg5: memref<128x32xbf16, #tpu.memory_space<vmem>>) attributes {dimension_semantics = [#tpu.dimension_semantics<parallel>], iteration_bounds = array<i64: 1>, scalar_prefetch = 0 : i64, scratch_operands = 0 : i64, tpu.core_type = #tpu.core_type<tc>, window_params = [{transform_indices = @transform_0, window_bounds = array<i64: 1>}, {transform_indices = @transform_1, window_bounds = array<i64: 128, 256>}, {pipeline_mode = #tpu.pipeline_mode<synchronous>, transform_indices = @transform_2, window_bounds = array<i64: 256, 32>}, {pipeline_mode = #tpu.pipeline_mode<synchronous>, transform_indices = @transform_3, window_bounds = array<i64: 1, 32>}, {transform_indices = @transform_4, window_bounds = array<i64: 128, 32>}]} {
    %c0 = arith.constant 0 : index
    %c0_0 = arith.constant 0 : index
    %0 = vector.load %arg2[%c0, %c0_0] : memref<128x256xbf16, #tpu.memory_space<vmem>>, vector<128x256xbf16>
    %c0_1 = arith.constant 0 : index
    %c0_2 = arith.constant 0 : index
    %1 = vector.load %arg3[%c0_1, %c0_2] : memref<256x32xbf16, #tpu.memory_space<vmem>>, vector<256x32xbf16>
    %cst = arith.constant dense<0.000000e+00> : vector<128x32xf32>
    %2 = tpu.matmul %0, %1, %cst {dimension_numbers = #tpu.dot_dimension_numbers<[1], [0], [0], [1], [0, 0, 1, 1], [], []>} : vector<128x256xbf16>, vector<256x32xbf16>, vector<128x32xf32> -> vector<128x32xf32>
    %c0_3 = arith.constant 0 : index
    %3 = memref.load %arg1[%c0_3] : memref<1xf32, #tpu.memory_space<smem>>
    %4 = vector.broadcast %3 : f32 to vector<128x32xf32>
    %5 = arith.mulf %2, %4 : vector<128x32xf32>
    %c0_4 = arith.constant 0 : index
    %c0_5 = arith.constant 0 : index
    %6 = vector.load %arg4[%c0_4, %c0_5] : memref<1x32xf32, #tpu.memory_space<vmem>>, vector<1x32xf32>
    %7 = vector.broadcast %6 : vector<1x32xf32> to vector<128x32xf32>
    %8 = arith.addf %5, %7 : vector<128x32xf32>
    %cst_6 = arith.constant 0.000000e+00 : f32
    %9 = vector.broadcast %cst_6 : f32 to vector<128x32xf32>
    %10 = arith.maximumf %8, %9 : vector<128x32xf32>
    %11 = arith.truncf %10 : vector<128x32xf32> to vector<128x32xbf16>
    %c0_7 = arith.constant 0 : index
    %c0_8 = arith.constant 0 : index
    %12 = vector.load %arg5[%c0_7, %c0_8] : memref<128x32xbf16, #tpu.memory_space<vmem>>, vector<128x32xbf16>
    tpu.vector_store %arg5[%c0_7, %c0_8], %11 {strides = array<i32>} : memref<128x32xbf16, #tpu.memory_space<vmem>>, vector<128x32xbf16>,
    return
  }
  func.func @transform_0(%arg0: i32) -> i32 {
    %c0_i32 = arith.constant 0 : i32
    %c0_i32_0 = arith.constant 0 : i32
    return %c0_i32 : i32
  }
  func.func @transform_1(%arg0: i32) -> (i32, i32) {
    %c0_i32 = arith.constant 0 : i32
    %c0_i32_0 = arith.constant 0 : i32
    return %arg0, %c0_i32 : i32, i32
  }
  func.func @transform_2(%arg0: i32) -> (i32, i32) {
    %c0_i32 = arith.constant 0 : i32
    %c0_i32_0 = arith.constant 0 : i32
    %c0_i32_1 = arith.constant 0 : i32
    return %c0_i32, %c0_i32_0 : i32, i32
  }
  func.func @transform_3(%arg0: i32) -> (i32, i32) {
    %c0_i32 = arith.constant 0 : i32
    %c0_i32_0 = arith.constant 0 : i32
    %c0_i32_1 = arith.constant 0 : i32
    return %c0_i32, %c0_i32_0 : i32, i32
  }
  func.func @transform_4(%arg0: i32) -> (i32, i32) {
    %c0_i32 = arith.constant 0 : i32
    %c0_i32_0 = arith.constant 0 : i32
    return %arg0, %c0_i32 : i32, i32
  }
}

module attributes {stable_mosaic.version = 11 : i64} {
  func.func @_matmul_bias_relu_kernel(%arg0: i32, %arg1: memref<1xf32, #tpu.memory_space<smem>>, %arg2: memref<24x512xbf16, #tpu.memory_space<vmem>>, %arg3: memref<512x64xbf16, #tpu.memory_space<vmem>>, %arg4: memref<1x64xf32, #tpu.memory_space<vmem>>, %arg5: memref<24x64xbf16, #tpu.memory_space<vmem>>) attributes {dimension_semantics = [#tpu.dimension_semantics<parallel>], iteration_bounds = array<i64: 1>, scalar_prefetch = 0 : i64, scratch_operands = 0 : i64, tpu.core_type = #tpu.core_type<tc>, window_params = [{transform_indices = @transform_0, window_bounds = array<i64: 1>}, {transform_indices = @transform_1, window_bounds = array<i64: 24, 512>}, {pipeline_mode = #tpu.pipeline_mode<synchronous>, transform_indices = @transform_2, window_bounds = array<i64: 512, 64>}, {pipeline_mode = #tpu.pipeline_mode<synchronous>, transform_indices = @transform_3, window_bounds = array<i64: 1, 64>}, {transform_indices = @transform_4, window_bounds = array<i64: 24, 64>}]} {
    %c0 = arith.constant 0 : index
    %c0_0 = arith.constant 0 : index
    %0 = vector.load %arg2[%c0, %c0_0] : memref<24x512xbf16, #tpu.memory_space<vmem>>, vector<24x512xbf16>
    %c0_1 = arith.constant 0 : index
    %c0_2 = arith.constant 0 : index
    %1 = vector.load %arg3[%c0_1, %c0_2] : memref<512x64xbf16, #tpu.memory_space<vmem>>, vector<512x64xbf16>
    %cst = arith.constant dense<0.000000e+00> : vector<24x64xf32>
    %2 = tpu.matmul %0, %1, %cst {dimension_numbers = #tpu.dot_dimension_numbers<[1], [0], [0], [1], [0, 0, 1, 1], [], []>} : vector<24x512xbf16>, vector<512x64xbf16>, vector<24x64xf32> -> vector<24x64xf32>
    %c0_3 = arith.constant 0 : index
    %3 = memref.load %arg1[%c0_3] : memref<1xf32, #tpu.memory_space<smem>>
    %4 = vector.broadcast %3 : f32 to vector<24x64xf32>
    %5 = arith.mulf %2, %4 : vector<24x64xf32>
    %c0_4 = arith.constant 0 : index
    %c0_5 = arith.constant 0 : index
    %6 = vector.load %arg4[%c0_4, %c0_5] : memref<1x64xf32, #tpu.memory_space<vmem>>, vector<1x64xf32>
    %7 = vector.broadcast %6 : vector<1x64xf32> to vector<24x64xf32>
    %8 = arith.addf %5, %7 : vector<24x64xf32>
    %cst_6 = arith.constant 0.000000e+00 : f32
    %9 = vector.broadcast %cst_6 : f32 to vector<24x64xf32>
    %10 = arith.maximumf %8, %9 : vector<24x64xf32>
    %11 = arith.truncf %10 : vector<24x64xf32> to vector<24x64xbf16>
    %c0_7 = arith.constant 0 : index
    %c0_8 = arith.constant 0 : index
    %12 = vector.load %arg5[%c0_7, %c0_8] : memref<24x64xbf16, #tpu.memory_space<vmem>>, vector<24x64xbf16>
    tpu.vector_store %arg5[%c0_7, %c0_8], %11 {strides = array<i32>} : memref<24x64xbf16, #tpu.memory_space<vmem>>, vector<24x64xbf16>,
    return
  }
  func.func @transform_0(%arg0: i32) -> i32 {
    %c0_i32 = arith.constant 0 : i32
    %c0_i32_0 = arith.constant 0 : i32
    return %c0_i32 : i32
  }
  func.func @transform_1(%arg0: i32) -> (i32, i32) {
    %c0_i32 = arith.constant 0 : i32
    %c0_i32_0 = arith.constant 0 : i32
    return %arg0, %c0_i32 : i32, i32
  }
  func.func @transform_2(%arg0: i32) -> (i32, i32) {
    %c0_i32 = arith.constant 0 : i32
    %c0_i32_0 = arith.constant 0 : i32
    %c0_i32_1 = arith.constant 0 : i32
    return %c0_i32, %c0_i32_0 : i32, i32
  }
  func.func @transform_3(%arg0: i32) -> (i32, i32) {
    %c0_i32 = arith.constant 0 : i32
    %c0_i32_0 = arith.constant 0 : i32
    %c0_i32_1 = arith.constant 0 : i32
    return %c0_i32, %c0_i32_0 : i32, i32
  }
  func.func @transform_4(%arg0: i32) -> (i32, i32) {
    %c0_i32 = arith.constant 0 : i32
    %c0_i32_0 = arith.constant 0 : i32
    return %arg0, %c0_i32 : i32, i32
  }
}

module attributes {stable_mosaic.version = 11 : i64} {
  func.func @_matmul_bias_relu_kernel(%arg0: i32, %arg1: memref<1xf32, #tpu.memory_space<smem>>, %arg2: memref<8x128xbf16, #tpu.memory_space<vmem>>, %arg3: memref<128x256xbf16, #tpu.memory_space<vmem>>, %arg4: memref<1x256xf32, #tpu.memory_space<vmem>>, %arg5: memref<8x256xf32, #tpu.memory_space<vmem>>) attributes {dimension_semantics = [#tpu.dimension_semantics<parallel>], iteration_bounds = array<i64: 1>, scalar_prefetch = 0 : i64, scratch_operands = 0 : i64, tpu.core_type = #tpu.core_type<tc>, window_params = [{transform_indices = @transform_0, window_bounds = array<i64: 1>}, {transform_indices = @transform_1, window_bounds = array<i64: 8, 128>}, {pipeline_mode = #tpu.pipeline_mode<synchronous>, transform_indices = @transform_2, window_bounds = array<i64: 128, 256>}, {pipeline_mode = #tpu.pipeline_mode<synchronous>, transform_indices = @transform_3, window_bounds = array<i64: 1, 256>}, {transform_indices = @transform_4, window_bounds = array<i64: 8, 256>}]} {
    %c0 = arith.constant 0 : index
    %c0_0 = arith.constant 0 : index
    %0 = vector.load %arg2[%c0, %c0_0] : memref<8x128xbf16, #tpu.memory_space<vmem>>, vector<8x128xbf16>
    %c0_1 = arith.constant 0 : index
    %c0_2 = arith.constant 0 : index
    %1 = vector.load %arg3[%c0_1, %c0_2] : memref<128x256xbf16, #tpu.memory_space<vmem>>, vector<128x256xbf16>
    %cst = arith.constant dense<0.000000e+00> : vector<8x256xf32>
    %2 = tpu.matmul %0, %1, %cst {dimension_numbers = #tpu.dot_dimension_numbers<[1], [0], [0], [1], [0, 0, 1, 1], [], []>} : vector<8x128xbf16>, vector<128x256xbf16>, vector<8x256xf32> -> vector<8x256xf32>
    %c0_3 = arith.constant 0 : index
    %3 = memref.load %arg1[%c0_3] : memref<1xf32, #tpu.memory_space<smem>>
    %4 = vector.broadcast %3 : f32 to vector<8x256xf32>
    %5 = arith.mulf %2, %4 : vector<8x256xf32>
    %c0_4 = arith.constant 0 : index
    %c0_5 = arith.constant 0 : index
    %6 = vector.load %arg4[%c0_4, %c0_5] : memref<1x256xf32, #tpu.memory_space<vmem>>, vector<1x256xf32>
    %7 = vector.broadcast %6 : vector<1x256xf32> to vector<8x256xf32>
    %8 = arith.addf %5, %7 : vector<8x256xf32>
    %cst_6 = arith.constant 0.000000e+00 : f32
    %9 = vector.broadcast %cst_6 : f32 to vector<8x256xf32>
    %10 = arith.maximumf %8, %9 : vector<8x256xf32>
    %c0_7 = arith.constant 0 : index
    %c0_8 = arith.constant 0 : index
    %11 = vector.load %arg5[%c0_7, %c0_8] : memref<8x256xf32, #tpu.memory_space<vmem>>, vector<8x256xf32>
    tpu.vector_store %arg5[%c0_7, %c0_8], %10 {strides = array<i32>} : memref<8x256xf32, #tpu.memory_space<vmem>>, vector<8x256xf32>,
    return
  }
  func.func @transform_0(%arg0: i32) -> i32 {
    %c0_i32 = arith.constant 0 : i32
    %c0_i32_0 = arith.constant 0 : i32
    return %c0_i32 : i32
  }
  func.func @transform_1(%arg0: i32) -> (i32, i32) {
    %c0_i32 = arith.constant 0 : i32
    %c0_i32_0 = arith.constant 0 : i32
    return %arg0, %c0_i32 : i32, i32
  }
  func.func @transform_2(%arg0: i32) -> (i32, i32) {
    %c0_i32 = arith.constant 0 : i32
    %c0_i32_0 = arith.constant 0 : i32
    %c0_i32_1 = arith.constant 0 : i32
    return %c0_i32, %c0_i32_0 : i32, i32
  }
  func.func @transform_3(%arg0: i32) -> (i32, i32) {
    %c0_i32 = arith.constant 0 : i32
    %c0_i32_0 = arith.constant 0 : i32
    %c0_i32_1 = arith.constant 0 : i32
    return %c0_i32, %c0_i32_0 : i32, i32
  }
  func.func @transform_4(%arg0: i32) -> (i32, i32) {
    %c0_i32 = arith.constant 0 : i32
    %c0_i32_0 = arith.constant 0 : i32
    return %arg0, %c0_i32 : i32, i32
  }
}

module attributes {stable_mosaic.version = 11 : i64} {
  func.func @_matmul_bias_relu_kernel(%arg0: i32, %arg1: memref<1xf32, #tpu.memory_space<smem>>, %arg2: memref<8x640xbf16, #tpu.memory_space<vmem>>, %arg3: memref<640x64xbf16, #tpu.memory_space<vmem>>, %arg4: memref<1x64xf32, #tpu.memory_space<vmem>>, %arg5: memref<8x64xbf16, #tpu.memory_space<vmem>>) attributes {dimension_semantics = [#tpu.dimension_semantics<parallel>], iteration_bounds = array<i64: 1>, scalar_prefetch = 0 : i64, scratch_operands = 0 : i64, tpu.core_type = #tpu.core_type<tc>, window_params = [{transform_indices = @transform_0, window_bounds = array<i64: 1>}, {transform_indices = @transform_1, window_bounds = array<i64: 8, 640>}, {pipeline_mode = #tpu.pipeline_mode<synchronous>, transform_indices = @transform_2, window_bounds = array<i64: 640, 64>}, {pipeline_mode = #tpu.pipeline_mode<synchronous>, transform_indices = @transform_3, window_bounds = array<i64: 1, 64>}, {transform_indices = @transform_4, window_bounds = array<i64: 8, 64>}]} {
    %c0 = arith.constant 0 : index
    %c0_0 = arith.constant 0 : index
    %0 = vector.load %arg2[%c0, %c0_0] : memref<8x640xbf16, #tpu.memory_space<vmem>>, vector<8x640xbf16>
    %c0_1 = arith.constant 0 : index
    %c0_2 = arith.constant 0 : index
    %1 = vector.load %arg3[%c0_1, %c0_2] : memref<640x64xbf16, #tpu.memory_space<vmem>>, vector<640x64xbf16>
    %cst = arith.constant dense<0.000000e+00> : vector<8x64xf32>
    %2 = tpu.matmul %0, %1, %cst {dimension_numbers = #tpu.dot_dimension_numbers<[1], [0], [0], [1], [0, 0, 1, 1], [], []>} : vector<8x640xbf16>, vector<640x64xbf16>, vector<8x64xf32> -> vector<8x64xf32>
    %c0_3 = arith.constant 0 : index
    %3 = memref.load %arg1[%c0_3] : memref<1xf32, #tpu.memory_space<smem>>
    %4 = vector.broadcast %3 : f32 to vector<8x64xf32>
    %5 = arith.mulf %2, %4 : vector<8x64xf32>
    %c0_4 = arith.constant 0 : index
    %c0_5 = arith.constant 0 : index
    %6 = vector.load %arg4[%c0_4, %c0_5] : memref<1x64xf32, #tpu.memory_space<vmem>>, vector<1x64xf32>
    %7 = vector.broadcast %6 : vector<1x64xf32> to vector<8x64xf32>
    %8 = arith.addf %5, %7 : vector<8x64xf32>
    %cst_6 = arith.constant 0.000000e+00 : f32
    %9 = vector.broadcast %cst_6 : f32 to vector<8x64xf32>
    %10 = arith.maximumf %8, %9 : vector<8x64xf32>
    %11 = arith.truncf %10 : vector<8x64xf32> to vector<8x64xbf16>
    %c0_7 = arith.constant 0 : index
    %c0_8 = arith.constant 0 : index
    %12 = vector.load %arg5[%c0_7, %c0_8] : memref<8x64xbf16, #tpu.memory_space<vmem>>, vector<8x64xbf16>
    tpu.vector_store %arg5[%c0_7, %c0_8], %11 {strides = array<i32>} : memref<8x64xbf16, #tpu.memory_space<vmem>>, vector<8x64xbf16>,
    return
  }
  func.func @transform_0(%arg0: i32) -> i32 {
    %c0_i32 = arith.constant 0 : i32
    %c0_i32_0 = arith.constant 0 : i32
    return %c0_i32 : i32
  }
  func.func @transform_1(%arg0: i32) -> (i32, i32) {
    %c0_i32 = arith.constant 0 : i32
    %c0_i32_0 = arith.constant 0 : i32
    return %arg0, %c0_i32 : i32, i32
  }
  func.func @transform_2(%arg0: i32) -> (i32, i32) {
    %c0_i32 = arith.constant 0 : i32
    %c0_i32_0 = arith.constant 0 : i32
    %c0_i32_1 = arith.constant 0 : i32
    return %c0_i32, %c0_i32_0 : i32, i32
  }
  func.func @transform_3(%arg0: i32) -> (i32, i32) {
    %c0_i32 = arith.constant 0 : i32
    %c0_i32_0 = arith.constant 0 : i32
    %c0_i32_1 = arith.constant 0 : i32
    return %c0_i32, %c0_i32_0 : i32, i32
  }
  func.func @transform_4(%arg0: i32) -> (i32, i32) {
    %c0_i32 = arith.constant 0 : i32
    %c0_i32_0 = arith.constant 0 : i32
    return %arg0, %c0_i32 : i32, i32
  }
}

</mosaic_0001>

<llo_original>
// kernel: _lambda_.4
$region0: #{_lambda_.4}
  #allocation0 [shape = 'u32[]', space=smem, size = 0x4, offset = 0x4, fixed_abs, tag = 'smem constant byte address 0x4 - core index']
  #allocation1 [shape = 'u32[144,128]{1,0:T(1,128)}', space=vmem, size = 0x12000, scoped, tag = 'internal scratch']
  #allocation2 [shape = 'f32[1]{0:T(128)S(6)}', space=smem, size = 0x200, scoped, tag = 'scoped memory for _lambda_.4']
  %s0 = inlined_call_operand.<no memory space> [shape: f32[1], index: 0, kind: input, shape index: {}]
  %s1 = inlined_call_operand.vmem [shape: bf16[128,256], index: 1, kind: input, shape index: {}]
  %s2 = inlined_call_operand.vmem [shape: bf16[256,32], index: 2, kind: input, shape index: {}]
  %s3 = inlined_call_operand.vmem [shape: f32[1,32], index: 3, kind: input, shape index: {}]
  %s4 = inlined_call_operand.vmem [shape: bf16[128,32], index: 4, kind: output, shape index: {}]
  %s5 = sld [smem:[#allocation0]]
  $region26: #{_lambda_.4} parent=0
    _
  %s7 = ssub.s32 1, %s5
  %s8 = scalar_select 0, %s7, %s5
  %9 = sst [smem:[#allocation2]] %s0
  // Predicated region
  $region2: #{_lambda_.4} parent=0 // pred_check
    _
  $region3: #{_lambda_.4} parent=0 // pred_check_branch
    %11 = sbr.rel (0) target = $region5
  $region4: #{_lambda_.4} parent=0 // pred_region
    _
  $region5: #{_lambda_.4} parent=0 // pred_fallthru
    _
  // Predicated region
  $region6: #{_lambda_.4} parent=0 // pred_check
    _
  $region7: #{_lambda_.4} parent=0 // pred_check_branch
    %13 = sbr.rel (0) target = $region9
  $region8: #{_lambda_.4} parent=0 // pred_region
    _
  $region9: #{_lambda_.4} parent=0 // pred_fallthru
    _
  // Predicated region
  $region10: #{_lambda_.4} parent=0 // pred_check
    _
  $region11: #{_lambda_.4} parent=0 // pred_check_branch
    %15 = sbr.rel (0) target = $region13
  $region12: #{_lambda_.4} parent=0 // pred_region
    _
  $region13: #{_lambda_.4} parent=0 // pred_fallthru
    _
  // Predicated region
  $region14: #{_lambda_.4} parent=0 // pred_check
    _
  $region15: #{_lambda_.4} parent=0 // pred_check_branch
    %17 = sbr.rel (0) target = $region17
  $region16: #{_lambda_.4} parent=0 // pred_region
    _
  $region17: #{_lambda_.4} parent=0 // pred_fallthru
    _
  %v19 = vld [vmem:[%s1] sm:$0xff]
  %v20 = vld [vmem:[%s1 + $0x8] sm:$0xff]
  %v21 = vld [vmem:[%s1 + $0x10] sm:$0xff]
  %v22 = vld [vmem:[%s1 + $0x18] sm:$0xff]
  %v23 = vld [vmem:[%s1 + $0x20] sm:$0xff]
  %v24 = vld [vmem:[%s1 + $0x28] sm:$0xff]
  %v25 = vld [vmem:[%s1 + $0x30] sm:$0xff]
  %v26 = vld [vmem:[%s1 + $0x38] sm:$0xff]
  %v27 = vld [vmem:[%s1 + $0x40] sm:$0xff]
  %v28 = vld [vmem:[%s1 + $0x48] sm:$0xff]
  %v29 = vld [vmem:[%s1 + $0x50] sm:$0xff]
  %v30 = vld [vmem:[%s1 + $0x58] sm:$0xff]
  %v31 = vld [vmem:[%s1 + $0x60] sm:$0xff]
  %v32 = vld [vmem:[%s1 + $0x68] sm:$0xff]
  %v33 = vld [vmem:[%s1 + $0x70] sm:$0xff]
  %v34 = vld [vmem:[%s1 + $0x78] sm:$0xff]
  %v35 = vld [vmem:[%s2] sm:$0xf]
  %v36 = vld [vmem:[%s2 + $0x4] sm:$0xf]
  %v37 = vld [vmem:[%s2 + $0x8] sm:$0xf]
  %v38 = vld [vmem:[%s2 + $0xc] sm:$0xf]
  %v39 = vld [vmem:[%s2 + $0x10] sm:$0xf]
  %v40 = vld [vmem:[%s2 + $0x14] sm:$0xf]
  %v41 = vld [vmem:[%s2 + $0x18] sm:$0xf]
  %v42 = vld [vmem:[%s2 + $0x1c] sm:$0xf]
  %v43 = vld [vmem:[%s2 + $0x20] sm:$0xf]
  %v44 = vld [vmem:[%s2 + $0x24] sm:$0xf]
  %v45 = vld [vmem:[%s2 + $0x28] sm:$0xf]
  %v46 = vld [vmem:[%s2 + $0x2c] sm:$0xf]
  %v47 = vld [vmem:[%s2 + $0x30] sm:$0xf]
  %v48 = vld [vmem:[%s2 + $0x34] sm:$0xf]
  %v49 = vld [vmem:[%s2 + $0x38] sm:$0xf]
  %v50 = vld [vmem:[%s2 + $0x3c] sm:$0xf]
  %v51 = vld [vmem:[%s2 + $0x40] sm:$0xf]
  %v52 = vld [vmem:[%s2 + $0x44] sm:$0xf]
  %v53 = vld [vmem:[%s2 + $0x48] sm:$0xf]
  %v54 = vld [vmem:[%s2 + $0x4c] sm:$0xf]
  %v55 = vld [vmem:[%s2 + $0x50] sm:$0xf]
  %v56 = vld [vmem:[%s2 + $0x54] sm:$0xf]
  %v57 = vld [vmem:[%s2 + $0x58] sm:$0xf]
  %v58 = vld [vmem:[%s2 + $0x5c] sm:$0xf]
  %v59 = vld [vmem:[%s2 + $0x60] sm:$0xf]
  %v60 = vld [vmem:[%s2 + $0x64] sm:$0xf]
  %v61 = vld [vmem:[%s2 + $0x68] sm:$0xf]
  %v62 = vld [vmem:[%s2 + $0x6c] sm:$0xf]
  %v63 = vld [vmem:[%s2 + $0x70] sm:$0xf]
  %v64 = vld [vmem:[%s2 + $0x74] sm:$0xf]
  %v65 = vld [vmem:[%s2 + $0x78] sm:$0xf]
  %v66 = vld [vmem:[%s2 + $0x7c] sm:$0xf]
  %v83 = vunpack.c.l.b16 %v19
  %v84 = vunpack.c.h.b16 %v19
  %v85 = vunpack.c.l.b16 %v20
  %v86 = vunpack.c.h.b16 %v20
  %v87 = vunpack.c.l.b16 %v21
  %v88 = vunpack.c.h.b16 %v21
  %v89 = vunpack.c.l.b16 %v22
  %v90 = vunpack.c.h.b16 %v22
  %v91 = vunpack.c.l.b16 %v23
  %v92 = vunpack.c.h.b16 %v23
  %v93 = vunpack.c.l.b16 %v24
  %v94 = vunpack.c.h.b16 %v24
  %v95 = vunpack.c.l.b16 %v25
  %v96 = vunpack.c.h.b16 %v25
  %v97 = vunpack.c.l.b16 %v26
  %v98 = vunpack.c.h.b16 %v26
  %v99 = vunpack.c.l.b16 %v27
  %v100 = vunpack.c.h.b16 %v27
  %v101 = vunpack.c.l.b16 %v28
  %v102 = vunpack.c.h.b16 %v28
  %v103 = vunpack.c.l.b16 %v29
  %v104 = vunpack.c.h.b16 %v29
  %v105 = vunpack.c.l.b16 %v30
  %v106 = vunpack.c.h.b16 %v30
  %v107 = vunpack.c.l.b16 %v31
  %v108 = vunpack.c.h.b16 %v31
  %v109 = vunpack.c.l.b16 %v32
  %v110 = vunpack.c.h.b16 %v32
  %v111 = vunpack.c.l.b16 %v33
  %v112 = vunpack.c.h.b16 %v33
  %v113 = vunpack.c.l.b16 %v34
  %v114 = vunpack.c.h.b16 %v34
  %v115 = vpack.c.b16 %v85, %v83
  %v116 = vpack.c.b16 %v86, %v84
  %v117 = vpack.c.b16 %v89, %v87
  %v118 = vpack.c.b16 %v90, %v88
  %v119 = vpack.c.b16 %v93, %v91
  %v120 = vpack.c.b16 %v94, %v92
  %v121 = vpack.c.b16 %v97, %v95
  %v122 = vpack.c.b16 %v98, %v96
  %v123 = vpack.c.b16 %v101, %v99
  %v124 = vpack.c.b16 %v102, %v100
  %v125 = vpack.c.b16 %v105, %v103
  %v126 = vpack.c.b16 %v106, %v104
  %v127 = vpack.c.b16 %v109, %v107
  %v128 = vpack.c.b16 %v110, %v108
  %v129 = vpack.c.b16 %v113, %v111
  %v130 = vpack.c.b16 %v114, %v112
  %v179 = vunpack.c.l.b16 %v35
  %v180 = vunpack.c.l.b16 %v36
  %v181 = vunpack.c.l.b16 %v37
  %v182 = vunpack.c.l.b16 %v38
  %v183 = vunpack.c.l.b16 %v39
  %v184 = vunpack.c.l.b16 %v40
  %v185 = vunpack.c.l.b16 %v41
  %v186 = vunpack.c.l.b16 %v42
  %v187 = vunpack.c.l.b16 %v43
  %v188 = vunpack.c.l.b16 %v44
  %v189 = vunpack.c.l.b16 %v45
  %v190 = vunpack.c.l.b16 %v46
  %v191 = vunpack.c.l.b16 %v47
  %v192 = vunpack.c.l.b16 %v48
  %v193 = vunpack.c.l.b16 %v49
  %v194 = vunpack.c.l.b16 %v50
  %v195 = vunpack.c.l.b16 %v51
  %v196 = vunpack.c.l.b16 %v52
  %v197 = vunpack.c.l.b16 %v53
  %v198 = vunpack.c.l.b16 %v54
  %v199 = vunpack.c.l.b16 %v55
  %v200 = vunpack.c.l.b16 %v56
  %v201 = vunpack.c.l.b16 %v57
  %v202 = vunpack.c.l.b16 %v58
  %v203 = vunpack.c.l.b16 %v59
  %v204 = vunpack.c.l.b16 %v60
  %v205 = vunpack.c.l.b16 %v61
  %v206 = vunpack.c.l.b16 %v62
  %v207 = vunpack.c.l.b16 %v63
  %v208 = vunpack.c.l.b16 %v64
  %v209 = vunpack.c.l.b16 %v65
  %v210 = vunpack.c.l.b16 %v66
  %v211 = vpack.c.b16 %v180, %v179
  %v212 = vpack.c.b16 %v182, %v181
  %v213 = vpack.c.b16 %v184, %v183
  %v214 = vpack.c.b16 %v186, %v185
  %v215 = vpack.c.b16 %v188, %v187
  %v216 = vpack.c.b16 %v190, %v189
  %v217 = vpack.c.b16 %v192, %v191
  %v218 = vpack.c.b16 %v194, %v193
  %v219 = vpack.c.b16 %v196, %v195
  %v220 = vpack.c.b16 %v198, %v197
  %v221 = vpack.c.b16 %v200, %v199
  %v222 = vpack.c.b16 %v202, %v201
  %v223 = vpack.c.b16 %v204, %v203
  %v224 = vpack.c.b16 %v206, %v205
  %v225 = vpack.c.b16 %v208, %v207
  %v226 = vpack.c.b16 %v210, %v209
  %243 = vmatprep.subr.bf16.mxu0 0
  %244 = vmatpush1.bf16.msra.mxu0 %v218
  %245 = vmatprep.subr.bf16.mxu0 0
  %246 = vmatpush1.bf16.msra.mxu0 %v217
  %247 = vmatprep.subr.bf16.mxu0 0
  %248 = vmatpush1.bf16.msra.mxu0 %v216
  %249 = vmatprep.subr.bf16.mxu0 0
  %250 = vmatpush1.bf16.msra.mxu0 %v215
  %251 = vmatprep.subr.bf16.mxu0 0
  %252 = vmatpush1.bf16.msra.mxu0 %v214
  %253 = vmatprep.subr.bf16.mxu0 0
  %254 = vmatpush1.bf16.msra.mxu0 %v213
  %255 = vmatprep.subr.bf16.mxu0 0
  %256 = vmatpush1.bf16.msra.mxu0 %v212
  %257 = vmatprep.subr.bf16.mxu0 0
  %258 = vmatpush1.bf16.msra.mxu0 %v211
  %259 = vmatprep.subr.bf16.mxu0 0
  %260 = vmatpush2.bf16.msra.mxu0 %v226
  %261 = vmatprep.subr.bf16.mxu0 0
  %262 = vmatpush2.bf16.msra.mxu0 %v225
  %263 = vmatprep.subr.bf16.mxu0 0
  %264 = vmatpush2.bf16.msra.mxu0 %v224
  %265 = vmatprep.subr.bf16.mxu0 0
  %266 = vmatpush2.bf16.msra.mxu0 %v223
  %267 = vmatprep.subr.bf16.mxu0 0
  %268 = vmatpush2.bf16.msra.mxu0 %v222
  %269 = vmatprep.subr.bf16.mxu0 0
  %270 = vmatpush2.bf16.msra.mxu0 %v221
  %271 = vmatprep.subr.bf16.mxu0 0
  %272 = vmatpush2.bf16.msra.mxu0 %v220
  %273 = vmatprep.subr.bf16.mxu0 0
  %274 = vmatpush2.bf16.msra.mxu0 %v219
  %275 = vmatprep.mubr.bf16.mxu0 %v116
  %276 = vmatmul.mubr.bf16.gmra.mxu0 %v115
  %v277 = vpop.f32.mrf.mxu0
  %v278 = vadd.f32 0.0, %v277
  %v279 = vpop.f32.mrf.mxu0
  %v280 = vpop.f32.mrf.mxu0
  %v281 = vadd.f32 0.0, %v280
  %v282 = vpop.f32.mrf.mxu0
  %283 = vmatprep.mubr.bf16.mxu0 %v118
  %284 = vmatmul.mubr.bf16.gmra.mxu0 %v117
  %v285 = vpop.f32.mrf.mxu0
  %v286 = vadd.f32 0.0, %v285
  %v287 = vpop.f32.mrf.mxu0
  %v288 = vpop.f32.mrf.mxu0
  %v289 = vadd.f32 0.0, %v288
  %v290 = vpop.f32.mrf.mxu0
  %291 = vmatprep.mubr.bf16.mxu0 %v120
  %292 = vmatmul.mubr.bf16.gmra.mxu0 %v119
  %v293 = vpop.f32.mrf.mxu0
  %v294 = vadd.f32 0.0, %v293
  %v295 = vpop.f32.mrf.mxu0
  %v296 = vpop.f32.mrf.mxu0
  %v297 = vadd.f32 0.0, %v296
  %v298 = vpop.f32.mrf.mxu0
  %299 = vmatprep.mubr.bf16.mxu0 %v122
  %300 = vmatmul.mubr.bf16.gmra.mxu0 %v121
  %v301 = vpop.f32.mrf.mxu0
  %v302 = vadd.f32 0.0, %v301
  %v303 = vpop.f32.mrf.mxu0
  %v304 = vpop.f32.mrf.mxu0
  %v305 = vadd.f32 0.0, %v304
  %v306 = vpop.f32.mrf.mxu0
  %307 = vmatprep.mubr.bf16.mxu0 %v124
  %308 = vmatmul.mubr.bf16.gmra.mxu0 %v123
  %v309 = vpop.f32.mrf.mxu0
  %v310 = vadd.f32 0.0, %v309
  %v311 = vpop.f32.mrf.mxu0
  %v312 = vpop.f32.mrf.mxu0
  %v313 = vadd.f32 0.0, %v312
  %v314 = vpop.f32.mrf.mxu0
  %315 = vmatprep.mubr.bf16.mxu0 %v126
  %316 = vmatmul.mubr.bf16.gmra.mxu0 %v125
  %v317 = vpop.f32.mrf.mxu0
  %v318 = vadd.f32 0.0, %v317
  %v319 = vpop.f32.mrf.mxu0
  %v320 = vpop.f32.mrf.mxu0
  %v321 = vadd.f32 0.0, %v320
  %v322 = vpop.f32.mrf.mxu0
  %323 = vmatprep.mubr.bf16.mxu0 %v128
  %324 = vmatmul.mubr.bf16.gmra.mxu0 %v127
  %v325 = vpop.f32.mrf.mxu0
  %v326 = vadd.f32 0.0, %v325
  %v327 = vpop.f32.mrf.mxu0
  %v328 = vpop.f32.mrf.mxu0
  %v329 = vadd.f32 0.0, %v328
  %v330 = vpop.f32.mrf.mxu0
  %331 = vmatprep.mubr.bf16.mxu0 %v130
  %332 = vmatmul.mubr.bf16.gmra.mxu0 %v129
  %v333 = vpop.f32.mrf.mxu0
  %v334 = vadd.f32 0.0, %v333
  %v335 = vpop.f32.mrf.mxu0
  %v336 = vpop.f32.mrf.mxu0
  %v337 = vadd.f32 0.0, %v336
  %v338 = vpop.f32.mrf.mxu0
  %339 = vdwg.mxu0
  %s340 = sld [smem:[#allocation2]]
  %v341 = vstv %s340
  %v342 = vmul.f32 %v278, %v341
  %v343 = vmul.f32 %v281, %v341
  %v344 = vmul.f32 %v286, %v341
  %v345 = vmul.f32 %v289, %v341
  %v346 = vmul.f32 %v294, %v341
  %v347 = vmul.f32 %v297, %v341
  %v348 = vmul.f32 %v302, %v341
  %v349 = vmul.f32 %v305, %v341
  %v350 = vmul.f32 %v310, %v341
  %v351 = vmul.f32 %v313, %v341
  %v352 = vmul.f32 %v318, %v341
  %v353 = vmul.f32 %v321, %v341
  %v354 = vmul.f32 %v326, %v341
  %v355 = vmul.f32 %v329, %v341
  %v356 = vmul.f32 %v334, %v341
  %v357 = vmul.f32 %v337, %v341
  %v358 = vld [vmem:[%s3] sm:$0x1]
  %v360 = vlaneseq
  %v361 = vshrl.u32 %v360, 7
  %v362 = vsub.s32 0, %v361
  %v363 = vrot.slane %v358, %v362
  %v365 = vadd.f32 %v342, %v363
  %v366 = vadd.f32 %v343, %v363
  %v367 = vadd.f32 %v344, %v363
  %v368 = vadd.f32 %v345, %v363
  %v369 = vadd.f32 %v346, %v363
  %v370 = vadd.f32 %v347, %v363
  %v371 = vadd.f32 %v348, %v363
  %v372 = vadd.f32 %v349, %v363
  %v373 = vadd.f32 %v350, %v363
  %v374 = vadd.f32 %v351, %v363
  %v375 = vadd.f32 %v352, %v363
  %v376 = vadd.f32 %v353, %v363
  %v377 = vadd.f32 %v354, %v363
  %v378 = vadd.f32 %v355, %v363
  %v379 = vadd.f32 %v356, %v363
  %v380 = vadd.f32 %v357, %v363
  %v381 = vmax.f32 %v365, 0.0
  %v382 = vmax.f32 %v366, 0.0
  %v383 = vmax.f32 %v367, 0.0
  %v384 = vmax.f32 %v368, 0.0
  %v385 = vmax.f32 %v369, 0.0
  %v386 = vmax.f32 %v370, 0.0
  %v387 = vmax.f32 %v371, 0.0
  %v388 = vmax.f32 %v372, 0.0
  %v389 = vmax.f32 %v373, 0.0
  %v390 = vmax.f32 %v374, 0.0
  %v391 = vmax.f32 %v375, 0.0
  %v392 = vmax.f32 %v376, 0.0
  %v393 = vmax.f32 %v377, 0.0
  %v394 = vmax.f32 %v378, 0.0
  %v395 = vmax.f32 %v379, 0.0
  %v396 = vmax.f32 %v380, 0.0
  %v397 = vpack.c.bf16 %v382, %v381
  %v398 = vpack.c.bf16 %v384, %v383
  %v399 = vpack.c.bf16 %v386, %v385
  %v400 = vpack.c.bf16 %v388, %v387
  %v401 = vpack.c.bf16 %v390, %v389
  %v402 = vpack.c.bf16 %v392, %v391
  %v403 = vpack.c.bf16 %v394, %v393
  %v404 = vpack.c.bf16 %v396, %v395
  %v413 = vunpack.c.l.b16 %v397
  %v414 = vunpack.c.h.b16 %v397
  %v415 = vunpack.c.l.b16 %v398
  %v416 = vunpack.c.h.b16 %v398
  %v417 = vunpack.c.l.b16 %v399
  %v418 = vunpack.c.h.b16 %v399
  %v419 = vunpack.c.l.b16 %v400
  %v420 = vunpack.c.h.b16 %v400
  %v421 = vunpack.c.l.b16 %v401
  %v422 = vunpack.c.h.b16 %v401
  %v423 = vunpack.c.l.b16 %v402
  %v424 = vunpack.c.h.b16 %v402
  %v425 = vunpack.c.l.b16 %v403
  %v426 = vunpack.c.h.b16 %v403
  %v427 = vunpack.c.l.b16 %v404
  %v428 = vunpack.c.h.b16 %v404
  %v429 = vpack.c.b16 %v413, %v413
  %v430 = vpack.c.b16 %v414, %v414
  %v431 = vpack.c.b16 %v415, %v415
  %v432 = vpack.c.b16 %v416, %v416
  %v433 = vpack.c.b16 %v417, %v417
  %v434 = vpack.c.b16 %v418, %v418
  %v435 = vpack.c.b16 %v419, %v419
  %v436 = vpack.c.b16 %v420, %v420
  %v437 = vpack.c.b16 %v421, %v421
  %v438 = vpack.c.b16 %v422, %v422
  %v439 = vpack.c.b16 %v423, %v423
  %v440 = vpack.c.b16 %v424, %v424
  %v441 = vpack.c.b16 %v425, %v425
  %v442 = vpack.c.b16 %v426, %v426
  %v443 = vpack.c.b16 %v427, %v427
  %v444 = vpack.c.b16 %v428, %v428
  %vm461 = vcmask 257024
  %462 = vst.msk [vmem:[%s4] sm:$0xf] %vm461, %v429
  %463 = vst.msk [vmem:[%s4 + $0x4] sm:$0xf] %vm461, %v430
  %464 = vst.msk [vmem:[%s4 + $0x8] sm:$0xf] %vm461, %v431
  %465 = vst.msk [vmem:[%s4 + $0xc] sm:$0xf] %vm461, %v432
  %466 = vst.msk [vmem:[%s4 + $0x10] sm:$0xf] %vm461, %v433
  %467 = vst.msk [vmem:[%s4 + $0x14] sm:$0xf] %vm461, %v434
  %468 = vst.msk [vmem:[%s4 + $0x18] sm:$0xf] %vm461, %v435
  %469 = vst.msk [vmem:[%s4 + $0x1c] sm:$0xf] %vm461, %v436
  %470 = vst.msk [vmem:[%s4 + $0x20] sm:$0xf] %vm461, %v437
  %471 = vst.msk [vmem:[%s4 + $0x24] sm:$0xf] %vm461, %v438
  %472 = vst.msk [vmem:[%s4 + $0x28] sm:$0xf] %vm461, %v439
  %473 = vst.msk [vmem:[%s4 + $0x2c] sm:$0xf] %vm461, %v440
  %474 = vst.msk [vmem:[%s4 + $0x30] sm:$0xf] %vm461, %v441
  %475 = vst.msk [vmem:[%s4 + $0x34] sm:$0xf] %vm461, %v442
  %476 = vst.msk [vmem:[%s4 + $0x38] sm:$0xf] %vm461, %v443
  %477 = vst.msk [vmem:[%s4 + $0x3c] sm:$0xf] %vm461, %v444
  // Predicated region
  $region18: #{_lambda_.4} parent=0 // pred_check
    _
  $region19: #{_lambda_.4} parent=0 // pred_check_branch
    %479 = sbr.rel (0) target = $region21
  $region20: #{_lambda_.4} parent=0 // pred_region
    _
  $region21: #{_lambda_.4} parent=0 // pred_fallthru
    _
  // Predicated region
  $region22: #{_lambda_.4} parent=0 // pred_check
    _
  $region23: #{_lambda_.4} parent=0 // pred_check_branch
    %481 = sbr.rel (0) target = $region25
  $region24: #{_lambda_.4} parent=0 // pred_region
    _
  $region25: #{_lambda_.4} parent=0 // pred_fallthru
    _

// kernel: _lambda_.5
$region0: #{_lambda_.5}
  #allocation0 [shape = 'u32[]', space=smem, size = 0x4, offset = 0x4, fixed_abs, tag = 'smem constant byte address 0x4 - core index']
  #allocation1 [shape = 'u32[144,128]{1,0:T(1,128)}', space=vmem, size = 0x12000, scoped, tag = 'internal scratch']
  #allocation2 [shape = 'f32[1]{0:T(128)S(6)}', space=smem, size = 0x200, scoped, tag = 'scoped memory for _lambda_.5']
  %s0 = inlined_call_operand.<no memory space> [shape: f32[1], index: 0, kind: input, shape index: {}]
  %s1 = inlined_call_operand.vmem [shape: bf16[24,512], index: 1, kind: input, shape index: {}]
  %s2 = inlined_call_operand.vmem [shape: bf16[512,64], index: 2, kind: input, shape index: {}]
  %s3 = inlined_call_operand.vmem [shape: f32[1,64], index: 3, kind: input, shape index: {}]
  %s4 = inlined_call_operand.vmem [shape: bf16[24,64], index: 4, kind: output, shape index: {}]
  %s5 = sld [smem:[#allocation0]]
  $region26: #{_lambda_.5} parent=0
    _
  %s7 = ssub.s32 1, %s5
  %s8 = scalar_select 0, %s7, %s5
  %9 = sst [smem:[#allocation2]] %s0
  // Predicated region
  $region2: #{_lambda_.5} parent=0 // pred_check
    _
  $region3: #{_lambda_.5} parent=0 // pred_check_branch
    %11 = sbr.rel (0) target = $region5
  $region4: #{_lambda_.5} parent=0 // pred_region
    _
  $region5: #{_lambda_.5} parent=0 // pred_fallthru
    _
  // Predicated region
  $region6: #{_lambda_.5} parent=0 // pred_check
    _
  $region7: #{_lambda_.5} parent=0 // pred_check_branch
    %13 = sbr.rel (0) target = $region9
  $region8: #{_lambda_.5} parent=0 // pred_region
    _
  $region9: #{_lambda_.5} parent=0 // pred_fallthru
    _
  // Predicated region
  $region10: #{_lambda_.5} parent=0 // pred_check
    _
  $region11: #{_lambda_.5} parent=0 // pred_check_branch
    %15 = sbr.rel (0) target = $region13
  $region12: #{_lambda_.5} parent=0 // pred_region
    _
  $region13: #{_lambda_.5} parent=0 // pred_fallthru
    _
  // Predicated region
  $region14: #{_lambda_.5} parent=0 // pred_check
    _
  $region15: #{_lambda_.5} parent=0 // pred_check_branch
    %17 = sbr.rel (0) target = $region17
  $region16: #{_lambda_.5} parent=0 // pred_region
    _
  $region17: #{_lambda_.5} parent=0 // pred_fallthru
    _
  %v19 = vld [vmem:[%s1] sm:$0xff]
  %v20 = vld [vmem:[%s1 + $0x8] sm:$0xff]
  %v21 = vld [vmem:[%s1 + $0x10] sm:$0xff]
  %v22 = vld [vmem:[%s1 + $0x18] sm:$0xff]
  %v23 = vld [vmem:[%s1 + $0x20] sm:$0xff]
  %v24 = vld [vmem:[%s1 + $0x28] sm:$0xff]
  %v25 = vld [vmem:[%s2] sm:$0xf]
  %v26 = vld [vmem:[%s2 + $0x4] sm:$0xf]
  %v27 = vld [vmem:[%s2 + $0x8] sm:$0xf]
  %v28 = vld [vmem:[%s2 + $0xc] sm:$0xf]
  %v29 = vld [vmem:[%s2 + $0x10] sm:$0xf]
  %v30 = vld [vmem:[%s2 + $0x14] sm:$0xf]
  %v31 = vld [vmem:[%s2 + $0x18] sm:$0xf]
  %v32 = vld [vmem:[%s2 + $0x1c] sm:$0xf]
  %v33 = vld [vmem:[%s2 + $0x20] sm:$0xf]
  %v34 = vld [vmem:[%s2 + $0x24] sm:$0xf]
  %v35 = vld [vmem:[%s2 + $0x28] sm:$0xf]
  %v36 = vld [vmem:[%s2 + $0x2c] sm:$0xf]
  %v37 = vld [vmem:[%s2 + $0x30] sm:$0xf]
  %v38 = vld [vmem:[%s2 + $0x34] sm:$0xf]
  %v39 = vld [vmem:[%s2 + $0x38] sm:$0xf]
  %v40 = vld [vmem:[%s2 + $0x3c] sm:$0xf]
  %v41 = vld [vmem:[%s2 + $0x40] sm:$0xf]
  %v42 = vld [vmem:[%s2 + $0x44] sm:$0xf]
  %v43 = vld [vmem:[%s2 + $0x48] sm:$0xf]
  %v44 = vld [vmem:[%s2 + $0x4c] sm:$0xf]
  %v45 = vld [vmem:[%s2 + $0x50] sm:$0xf]
  %v46 = vld [vmem:[%s2 + $0x54] sm:$0xf]
  %v47 = vld [vmem:[%s2 + $0x58] sm:$0xf]
  %v48 = vld [vmem:[%s2 + $0x5c] sm:$0xf]
  %v49 = vld [vmem:[%s2 + $0x60] sm:$0xf]
  %v50 = vld [vmem:[%s2 + $0x64] sm:$0xf]
  %v51 = vld [vmem:[%s2 + $0x68] sm:$0xf]
  %v52 = vld [vmem:[%s2 + $0x6c] sm:$0xf]
  %v53 = vld [vmem:[%s2 + $0x70] sm:$0xf]
  %v54 = vld [vmem:[%s2 + $0x74] sm:$0xf]
  %v55 = vld [vmem:[%s2 + $0x78] sm:$0xf]
  %v56 = vld [vmem:[%s2 + $0x7c] sm:$0xf]
  %v57 = vld [vmem:[%s2 + $0x80] sm:$0xf]
  %v58 = vld [vmem:[%s2 + $0x84] sm:$0xf]
  %v59 = vld [vmem:[%s2 + $0x88] sm:$0xf]
  %v60 = vld [vmem:[%s2 + $0x8c] sm:$0xf]
  %v61 = vld [vmem:[%s2 + $0x90] sm:$0xf]
  %v62 = vld [vmem:[%s2 + $0x94] sm:$0xf]
  %v63 = vld [vmem:[%s2 + $0x98] sm:$0xf]
  %v64 = vld [vmem:[%s2 + $0x9c] sm:$0xf]
  %v65 = vld [vmem:[%s2 + $0xa0] sm:$0xf]
  %v66 = vld [vmem:[%s2 + $0xa4] sm:$0xf]
  %v67 = vld [vmem:[%s2 + $0xa8] sm:$0xf]
  %v68 = vld [vmem:[%s2 + $0xac] sm:$0xf]
  %v69 = vld [vmem:[%s2 + $0xb0] sm:$0xf]
  %v70 = vld [vmem:[%s2 + $0xb4] sm:$0xf]
  %v71 = vld [vmem:[%s2 + $0xb8] sm:$0xf]
  %v72 = vld [vmem:[%s2 + $0xbc] sm:$0xf]
  %v73 = vld [vmem:[%s2 + $0xc0] sm:$0xf]
  %v74 = vld [vmem:[%s2 + $0xc4] sm:$0xf]
  %v75 = vld [vmem:[%s2 + $0xc8] sm:$0xf]
  %v76 = vld [vmem:[%s2 + $0xcc] sm:$0xf]
  %v77 = vld [vmem:[%s2 + $0xd0] sm:$0xf]
  %v78 = vld [vmem:[%s2 + $0xd4] sm:$0xf]
  %v79 = vld [vmem:[%s2 + $0xd8] sm:$0xf]
  %v80 = vld [vmem:[%s2 + $0xdc] sm:$0xf]
  %v81 = vld [vmem:[%s2 + $0xe0] sm:$0xf]
  %v82 = vld [vmem:[%s2 + $0xe4] sm:$0xf]
  %v83 = vld [vmem:[%s2 + $0xe8] sm:$0xf]
  %v84 = vld [vmem:[%s2 + $0xec] sm:$0xf]
  %v85 = vld [vmem:[%s2 + $0xf0] sm:$0xf]
  %v86 = vld [vmem:[%s2 + $0xf4] sm:$0xf]
  %v87 = vld [vmem:[%s2 + $0xf8] sm:$0xf]
  %v88 = vld [vmem:[%s2 + $0xfc] sm:$0xf]
  %v95 = vunpack.c.l.b16 %v19
  %v96 = vunpack.c.h.b16 %v19
  %v97 = vunpack.c.l.b16 %v20
  %v98 = vunpack.c.h.b16 %v20
  %v99 = vunpack.c.l.b16 %v21
  %v100 = vunpack.c.h.b16 %v21
  %v101 = vunpack.c.l.b16 %v22
  %v102 = vunpack.c.h.b16 %v22
  %v103 = vunpack.c.l.b16 %v23
  %v104 = vunpack.c.h.b16 %v23
  %v105 = vunpack.c.l.b16 %v24
  %v106 = vunpack.c.h.b16 %v24
  %v107 = vpack.c.b16 %v99, %v95
  %v108 = vpack.c.b16 %v100, %v96
  %v109 = vpack.c.b16 %v101, %v97
  %v110 = vpack.c.b16 %v102, %v98
  %v111 = vpack.c.b16 %v103, %v103
  %v112 = vpack.c.b16 %v104, %v104
  %v113 = vpack.c.b16 %v105, %v105
  %v114 = vpack.c.b16 %v106, %v106
  %v187 = vunpack.c.l.b16 %v25
  %v188 = vunpack.c.l.b16 %v26
  %v189 = vunpack.c.l.b16 %v27
  %v190 = vunpack.c.l.b16 %v28
  %v191 = vunpack.c.l.b16 %v29
  %v192 = vunpack.c.l.b16 %v30
  %v193 = vunpack.c.l.b16 %v31
  %v194 = vunpack.c.l.b16 %v32
  %v195 = vunpack.c.l.b16 %v33
  %v196 = vunpack.c.l.b16 %v34
  %v197 = vunpack.c.l.b16 %v35
  %v198 = vunpack.c.l.b16 %v36
  %v199 = vunpack.c.l.b16 %v37
  %v200 = vunpack.c.l.b16 %v38
  %v201 = vunpack.c.l.b16 %v39
  %v202 = vunpack.c.l.b16 %v40
  %v203 = vunpack.c.l.b16 %v41
  %v204 = vunpack.c.l.b16 %v42
  %v205 = vunpack.c.l.b16 %v43
  %v206 = vunpack.c.l.b16 %v44
  %v207 = vunpack.c.l.b16 %v45
  %v208 = vunpack.c.l.b16 %v46
  %v209 = vunpack.c.l.b16 %v47
  %v210 = vunpack.c.l.b16 %v48
  %v211 = vunpack.c.l.b16 %v49
  %v212 = vunpack.c.l.b16 %v50
  %v213 = vunpack.c.l.b16 %v51
  %v214 = vunpack.c.l.b16 %v52
  %v215 = vunpack.c.l.b16 %v53
  %v216 = vunpack.c.l.b16 %v54
  %v217 = vunpack.c.l.b16 %v55
  %v218 = vunpack.c.l.b16 %v56
  %v219 = vunpack.c.l.b16 %v57
  %v220 = vunpack.c.l.b16 %v58
  %v221 = vunpack.c.l.b16 %v59
  %v222 = vunpack.c.l.b16 %v60
  %v223 = vunpack.c.l.b16 %v61
  %v224 = vunpack.c.l.b16 %v62
  %v225 = vunpack.c.l.b16 %v63
  %v226 = vunpack.c.l.b16 %v64
  %v227 = vunpack.c.l.b16 %v65
  %v228 = vunpack.c.l.b16 %v66
  %v229 = vunpack.c.l.b16 %v67
  %v230 = vunpack.c.l.b16 %v68
  %v231 = vunpack.c.l.b16 %v69
  %v232 = vunpack.c.l.b16 %v70
  %v233 = vunpack.c.l.b16 %v71
  %v234 = vunpack.c.l.b16 %v72
  %v235 = vunpack.c.l.b16 %v73
  %v236 = vunpack.c.l.b16 %v74
  %v237 = vunpack.c.l.b16 %v75
  %v238 = vunpack.c.l.b16 %v76
  %v239 = vunpack.c.l.b16 %v77
  %v240 = vunpack.c.l.b16 %v78
  %v241 = vunpack.c.l.b16 %v79
  %v242 = vunpack.c.l.b16 %v80
  %v243 = vunpack.c.l.b16 %v81
  %v244 = vunpack.c.l.b16 %v82
  %v245 = vunpack.c.l.b16 %v83
  %v246 = vunpack.c.l.b16 %v84
  %v247 = vunpack.c.l.b16 %v85
  %v248 = vunpack.c.l.b16 %v86
  %v249 = vunpack.c.l.b16 %v87
  %v250 = vunpack.c.l.b16 %v88
  %v251 = vpack.c.b16 %v188, %v187
  %v252 = vpack.c.b16 %v190, %v189
  %v253 = vpack.c.b16 %v192, %v191
  %v254 = vpack.c.b16 %v194, %v193
  %v255 = vpack.c.b16 %v196, %v195
  %v256 = vpack.c.b16 %v198, %v197
  %v257 = vpack.c.b16 %v200, %v199
  %v258 = vpack.c.b16 %v202, %v201
  %v259 = vpack.c.b16 %v204, %v203
  %v260 = vpack.c.b16 %v206, %v205
  %v261 = vpack.c.b16 %v208, %v207
  %v262 = vpack.c.b16 %v210, %v209
  %v263 = vpack.c.b16 %v212, %v211
  %v264 = vpack.c.b16 %v214, %v213
  %v265 = vpack.c.b16 %v216, %v215
  %v266 = vpack.c.b16 %v218, %v217
  %v267 = vpack.c.b16 %v220, %v219
  %v268 = vpack.c.b16 %v222, %v221
  %v269 = vpack.c.b16 %v224, %v223
  %v270 = vpack.c.b16 %v226, %v225
  %v271 = vpack.c.b16 %v228, %v227
  %v272 = vpack.c.b16 %v230, %v229
  %v273 = vpack.c.b16 %v232, %v231
  %v274 = vpack.c.b16 %v234, %v233
  %v275 = vpack.c.b16 %v236, %v235
  %v276 = vpack.c.b16 %v238, %v237
  %v277 = vpack.c.b16 %v240, %v239
  %v278 = vpack.c.b16 %v242, %v241
  %v279 = vpack.c.b16 %v244, %v243
  %v280 = vpack.c.b16 %v246, %v245
  %v281 = vpack.c.b16 %v248, %v247
  %v282 = vpack.c.b16 %v250, %v249
  %315 = vmatprep.subr.bf16.mxu0 0
  %316 = vmatpush1.bf16.msra.mxu0 %v258
  %317 = vmatprep.subr.bf16.mxu0 0
  %318 = vmatpush1.bf16.msra.mxu0 %v257
  %319 = vmatprep.subr.bf16.mxu0 0
  %320 = vmatpush1.bf16.msra.mxu0 %v256
  %321 = vmatprep.subr.bf16.mxu0 0
  %322 = vmatpush1.bf16.msra.mxu0 %v255
  %323 = vmatprep.subr.bf16.mxu0 0
  %324 = vmatpush1.bf16.msra.mxu0 %v254
  %325 = vmatprep.subr.bf16.mxu0 0
  %326 = vmatpush1.bf16.msra.mxu0 %v253
  %327 = vmatprep.subr.bf16.mxu0 0
  %328 = vmatpush1.bf16.msra.mxu0 %v252
  %329 = vmatprep.subr.bf16.mxu0 0
  %330 = vmatpush1.bf16.msra.mxu0 %v251
  %331 = vmatprep.subr.bf16.mxu0 0
  %332 = vmatpush2.bf16.msra.mxu0 %v266
  %333 = vmatprep.subr.bf16.mxu0 0
  %334 = vmatpush2.bf16.msra.mxu0 %v265
  %335 = vmatprep.subr.bf16.mxu0 0
  %336 = vmatpush2.bf16.msra.mxu0 %v264
  %337 = vmatprep.subr.bf16.mxu0 0
  %338 = vmatpush2.bf16.msra.mxu0 %v263
  %339 = vmatprep.subr.bf16.mxu0 0
  %340 = vmatpush2.bf16.msra.mxu0 %v262
  %341 = vmatprep.subr.bf16.mxu0 0
  %342 = vmatpush2.bf16.msra.mxu0 %v261
  %343 = vmatprep.subr.bf16.mxu0 0
  %344 = vmatpush2.bf16.msra.mxu0 %v260
  %345 = vmatprep.subr.bf16.mxu0 0
  %346 = vmatpush2.bf16.msra.mxu0 %v259
  %347 = vmatprep.mubr.bf16.mxu0 %v108
  %348 = vmatmul.mubr.bf16.gmra.mxu0 %v107
  %v349 = vpop.f32.mrf.mxu0
  %v350 = vadd.f32 0.0, %v349
  %v351 = vpop.f32.mrf.mxu0
  %v352 = vpop.f32.mrf.mxu0
  %v353 = vadd.f32 0.0, %v352
  %v354 = vpop.f32.mrf.mxu0
  %355 = vmatprep.mubr.bf16.mxu0 %v112
  %356 = vmatmul.mubr.bf16.gmra.mxu0 %v111
  %v357 = vpop.f32.mrf.mxu0
  %v358 = vadd.f32 0.0, %v357
  %v359 = vpop.f32.mrf.mxu0
  %v360 = vpop.f32.mrf.mxu0
  %v361 = vpop.f32.mrf.mxu0
  %362 = vdwg.mxu0
  %363 = vmatprep.subr.bf16.mxu0 0
  %364 = vmatpush1.bf16.msra.mxu0 %v274
  %365 = vmatprep.subr.bf16.mxu0 0
  %366 = vmatpush1.bf16.msra.mxu0 %v273
  %367 = vmatprep.subr.bf16.mxu0 0
  %368 = vmatpush1.bf16.msra.mxu0 %v272
  %369 = vmatprep.subr.bf16.mxu0 0
  %370 = vmatpush1.bf16.msra.mxu0 %v271
  %371 = vmatprep.subr.bf16.mxu0 0
  %372 = vmatpush1.bf16.msra.mxu0 %v270
  %373 = vmatprep.subr.bf16.mxu0 0
  %374 = vmatpush1.bf16.msra.mxu0 %v269
  %375 = vmatprep.subr.bf16.mxu0 0
  %376 = vmatpush1.bf16.msra.mxu0 %v268
  %377 = vmatprep.subr.bf16.mxu0 0
  %378 = vmatpush1.bf16.msra.mxu0 %v267
  %379 = vmatprep.subr.bf16.mxu0 0
  %380 = vmatpush2.bf16.msra.mxu0 %v282
  %381 = vmatprep.subr.bf16.mxu0 0
  %382 = vmatpush2.bf16.msra.mxu0 %v281
  %383 = vmatprep.subr.bf16.mxu0 0
  %384 = vmatpush2.bf16.msra.mxu0 %v280
  %385 = vmatprep.subr.bf16.mxu0 0
  %386 = vmatpush2.bf16.msra.mxu0 %v279
  %387 = vmatprep.subr.bf16.mxu0 0
  %388 = vmatpush2.bf16.msra.mxu0 %v278
  %389 = vmatprep.subr.bf16.mxu0 0
  %390 = vmatpush2.bf16.msra.mxu0 %v277
  %391 = vmatprep.subr.bf16.mxu0 0
  %392 = vmatpush2.bf16.msra.mxu0 %v276
  %393 = vmatprep.subr.bf16.mxu0 0
  %394 = vmatpush2.bf16.msra.mxu0 %v275
  %395 = vmatprep.mubr.bf16.mxu0 %v110
  %396 = vmatmul.mubr.bf16.gmra.mxu0 %v109
  %v397 = vpop.f32.mrf.mxu0
  %v398 = vadd.f32 %v350, %v397
  %v399 = vpop.f32.mrf.mxu0
  %v400 = vpop.f32.mrf.mxu0
  %v401 = vadd.f32 %v353, %v400
  %v402 = vpop.f32.mrf.mxu0
  %403 = vmatprep.mubr.bf16.mxu0 %v114
  %404 = vmatmul.mubr.bf16.gmra.mxu0 %v113
  %v405 = vpop.f32.mrf.mxu0
  %v406 = vadd.f32 %v358, %v405
  %v407 = vpop.f32.mrf.mxu0
  %v408 = vpop.f32.mrf.mxu0
  %v409 = vpop.f32.mrf.mxu0
  %410 = vdwg.mxu0
  %s411 = sld [smem:[#allocation2]]
  %v412 = vstv %s411
  %v413 = vmul.f32 %v398, %v412
  %v414 = vmul.f32 %v401, %v412
  %v415 = vmul.f32 %v406, %v412
  %v416 = vld [vmem:[%s3] sm:$0x1]
  %v418 = vlaneseq
  %v419 = vshrl.u32 %v418, 7
  %v420 = vsub.s32 0, %v419
  %v421 = vrot.slane %v416, %v420
  %v423 = vadd.f32 %v413, %v421
  %v424 = vadd.f32 %v414, %v421
  %v425 = vadd.f32 %v415, %v421
  %v426 = vmax.f32 %v423, 0.0
  %v427 = vmax.f32 %v424, 0.0
  %v428 = vmax.f32 %v425, 0.0
  %v429 = vpack.c.bf16 %v427, %v426
  %v430 = vpack.c.bf16 %v428, %v428
  %v433 = vunpack.c.l.b16 %v429
  %v434 = vunpack.c.h.b16 %v429
  %v435 = vunpack.c.l.b16 %v430
  %v436 = vpack.c.b16 %v433, %v433
  %v437 = vpack.c.b16 %v434, %v434
  %v438 = vpack.c.b16 %v435, %v435
  %vm442 = vcmask 519168
  %443 = vst.msk [vmem:[%s4] sm:$0xf] %vm442, %v436
  %444 = vst.msk [vmem:[%s4 + $0x4] sm:$0xf] %vm442, %v437
  %445 = vst.msk [vmem:[%s4 + $0x8] sm:$0xf] %vm442, %v438
  // Predicated region
  $region18: #{_lambda_.5} parent=0 // pred_check
    _
  $region19: #{_lambda_.5} parent=0 // pred_check_branch
    %447 = sbr.rel (0) target = $region21
  $region20: #{_lambda_.5} parent=0 // pred_region
    _
  $region21: #{_lambda_.5} parent=0 // pred_fallthru
    _
  // Predicated region
  $region22: #{_lambda_.5} parent=0 // pred_check
    _
  $region23: #{_lambda_.5} parent=0 // pred_check_branch
    %449 = sbr.rel (0) target = $region25
  $region24: #{_lambda_.5} parent=0 // pred_region
    _
  $region25: #{_lambda_.5} parent=0 // pred_fallthru
    _

// kernel: _lambda_.7
$region0: #{_lambda_.7}
  #allocation0 [shape = 'u32[]', space=smem, size = 0x4, offset = 0x4, fixed_abs, tag = 'smem constant byte address 0x4 - core index']
  #allocation1 [shape = 'u32[144,128]{1,0:T(1,128)}', space=vmem, size = 0x12000, scoped, tag = 'internal scratch']
  #allocation2 [shape = 'f32[1]{0:T(128)S(6)}', space=smem, size = 0x200, scoped, tag = 'scoped memory for _lambda_.7']
  %s0 = inlined_call_operand.<no memory space> [shape: f32[1], index: 0, kind: input, shape index: {}]
  %s1 = inlined_call_operand.vmem [shape: bf16[8,128], index: 1, kind: input, shape index: {}]
  %s2 = inlined_call_operand.vmem [shape: bf16[128,256], index: 2, kind: input, shape index: {}]
  %s3 = inlined_call_operand.vmem [shape: f32[1,256], index: 3, kind: input, shape index: {}]
  %s4 = inlined_call_operand.vmem [shape: f32[8,256], index: 4, kind: output, shape index: {}]
  %s5 = sld [smem:[#allocation0]]
  $region26: #{_lambda_.7} parent=0
    _
  %s7 = ssub.s32 1, %s5
  %s8 = scalar_select 0, %s7, %s5
  %9 = sst [smem:[#allocation2]] %s0
  // Predicated region
  $region2: #{_lambda_.7} parent=0 // pred_check
    _
  $region3: #{_lambda_.7} parent=0 // pred_check_branch
    %11 = sbr.rel (0) target = $region5
  $region4: #{_lambda_.7} parent=0 // pred_region
    _
  $region5: #{_lambda_.7} parent=0 // pred_fallthru
    _
  // Predicated region
  $region6: #{_lambda_.7} parent=0 // pred_check
    _
  $region7: #{_lambda_.7} parent=0 // pred_check_branch
    %13 = sbr.rel (0) target = $region9
  $region8: #{_lambda_.7} parent=0 // pred_region
    _
  $region9: #{_lambda_.7} parent=0 // pred_fallthru
    _
  // Predicated region
  $region10: #{_lambda_.7} parent=0 // pred_check
    _
  $region11: #{_lambda_.7} parent=0 // pred_check_branch
    %15 = sbr.rel (0) target = $region13
  $region12: #{_lambda_.7} parent=0 // pred_region
    _
  $region13: #{_lambda_.7} parent=0 // pred_fallthru
    _
  // Predicated region
  $region14: #{_lambda_.7} parent=0 // pred_check
    _
  $region15: #{_lambda_.7} parent=0 // pred_check_branch
    %17 = sbr.rel (0) target = $region17
  $region16: #{_lambda_.7} parent=0 // pred_region
    _
  $region17: #{_lambda_.7} parent=0 // pred_fallthru
    _
  %v19 = vld [vmem:[%s1] sm:$0xf]
  %v20 = vld [vmem:[%s2] sm:$0xff]
  %v21 = vld [vmem:[%s2 + $0x8] sm:$0xff]
  %v22 = vld [vmem:[%s2 + $0x10] sm:$0xff]
  %v23 = vld [vmem:[%s2 + $0x18] sm:$0xff]
  %v24 = vld [vmem:[%s2 + $0x20] sm:$0xff]
  %v25 = vld [vmem:[%s2 + $0x28] sm:$0xff]
  %v26 = vld [vmem:[%s2 + $0x30] sm:$0xff]
  %v27 = vld [vmem:[%s2 + $0x38] sm:$0xff]
  %v28 = vld [vmem:[%s2 + $0x40] sm:$0xff]
  %v29 = vld [vmem:[%s2 + $0x48] sm:$0xff]
  %v30 = vld [vmem:[%s2 + $0x50] sm:$0xff]
  %v31 = vld [vmem:[%s2 + $0x58] sm:$0xff]
  %v32 = vld [vmem:[%s2 + $0x60] sm:$0xff]
  %v33 = vld [vmem:[%s2 + $0x68] sm:$0xff]
  %v34 = vld [vmem:[%s2 + $0x70] sm:$0xff]
  %v35 = vld [vmem:[%s2 + $0x78] sm:$0xff]
  %v52 = vunpack.c.l.b16 %v20
  %v53 = vunpack.c.h.b16 %v20
  %v54 = vunpack.c.l.b16 %v21
  %v55 = vunpack.c.h.b16 %v21
  %v56 = vunpack.c.l.b16 %v22
  %v57 = vunpack.c.h.b16 %v22
  %v58 = vunpack.c.l.b16 %v23
  %v59 = vunpack.c.h.b16 %v23
  %v60 = vunpack.c.l.b16 %v24
  %v61 = vunpack.c.h.b16 %v24
  %v62 = vunpack.c.l.b16 %v25
  %v63 = vunpack.c.h.b16 %v25
  %v64 = vunpack.c.l.b16 %v26
  %v65 = vunpack.c.h.b16 %v26
  %v66 = vunpack.c.l.b16 %v27
  %v67 = vunpack.c.h.b16 %v27
  %v68 = vunpack.c.l.b16 %v28
  %v69 = vunpack.c.h.b16 %v28
  %v70 = vunpack.c.l.b16 %v29
  %v71 = vunpack.c.h.b16 %v29
  %v72 = vunpack.c.l.b16 %v30
  %v73 = vunpack.c.h.b16 %v30
  %v74 = vunpack.c.l.b16 %v31
  %v75 = vunpack.c.h.b16 %v31
  %v76 = vunpack.c.l.b16 %v32
  %v77 = vunpack.c.h.b16 %v32
  %v78 = vunpack.c.l.b16 %v33
  %v79 = vunpack.c.h.b16 %v33
  %v80 = vunpack.c.l.b16 %v34
  %v81 = vunpack.c.h.b16 %v34
  %v82 = vunpack.c.l.b16 %v35
  %v83 = vunpack.c.h.b16 %v35
  %v84 = vpack.c.b16 %v54, %v52
  %v85 = vpack.c.b16 %v55, %v53
  %v86 = vpack.c.b16 %v58, %v56
  %v87 = vpack.c.b16 %v59, %v57
  %v88 = vpack.c.b16 %v62, %v60
  %v89 = vpack.c.b16 %v63, %v61
  %v90 = vpack.c.b16 %v66, %v64
  %v91 = vpack.c.b16 %v67, %v65
  %v92 = vpack.c.b16 %v70, %v68
  %v93 = vpack.c.b16 %v71, %v69
  %v94 = vpack.c.b16 %v74, %v72
  %v95 = vpack.c.b16 %v75, %v73
  %v96 = vpack.c.b16 %v78, %v76
  %v97 = vpack.c.b16 %v79, %v77
  %v98 = vpack.c.b16 %v82, %v80
  %v99 = vpack.c.b16 %v83, %v81
  %116 = vmatprep.subr.bf16.mxu0 %v99
  %117 = vmatpush1.bf16.msra.mxu0 %v98
  %118 = vmatprep.subr.bf16.mxu0 %v97
  %119 = vmatpush1.bf16.msra.mxu0 %v96
  %120 = vmatprep.subr.bf16.mxu0 %v95
  %121 = vmatpush1.bf16.msra.mxu0 %v94
  %122 = vmatprep.subr.bf16.mxu0 %v93
  %123 = vmatpush1.bf16.msra.mxu0 %v92
  %124 = vmatprep.subr.bf16.mxu0 %v91
  %125 = vmatpush1.bf16.msra.mxu0 %v90
  %126 = vmatprep.subr.bf16.mxu0 %v89
  %127 = vmatpush1.bf16.msra.mxu0 %v88
  %128 = vmatprep.subr.bf16.mxu0 %v87
  %129 = vmatpush1.bf16.msra.mxu0 %v86
  %130 = vmatprep.subr.bf16.mxu0 %v85
  %131 = vmatpush1.bf16.msra.mxu0 %v84
  %132 = vmatprep.subr.bf16.mxu0 0
  %133 = vmatpush2.bf16.msra.mxu0 0
  %134 = vmatprep.subr.bf16.mxu0 0
  %135 = vmatpush2.bf16.msra.mxu0 0
  %136 = vmatprep.subr.bf16.mxu0 0
  %137 = vmatpush2.bf16.msra.mxu0 0
  %138 = vmatprep.subr.bf16.mxu0 0
  %139 = vmatpush2.bf16.msra.mxu0 0
  %140 = vmatprep.subr.bf16.mxu0 0
  %141 = vmatpush2.bf16.msra.mxu0 0
  %142 = vmatprep.subr.bf16.mxu0 0
  %143 = vmatpush2.bf16.msra.mxu0 0
  %144 = vmatprep.subr.bf16.mxu0 0
  %145 = vmatpush2.bf16.msra.mxu0 0
  %146 = vmatprep.subr.bf16.mxu0 0
  %147 = vmatpush2.bf16.msra.mxu0 0
  %148 = vmatprep.mubr.bf16.mxu0 0
  %149 = vmatmul.mubr.bf16.gmra.mxu0 %v19
  %v150 = vpop.f32.mrf.mxu0
  %v151 = vadd.f32 0.0, %v150
  %v152 = vpop.f32.mrf.mxu0
  %v153 = vadd.f32 0.0, %v152
  %v154 = vpop.f32.mrf.mxu0
  %v155 = vpop.f32.mrf.mxu0
  %156 = vdwg.mxu0
  %s157 = sld [smem:[#allocation2]]
  %v158 = vstv %s157
  %v159 = vmul.f32 %v151, %v158
  %v160 = vmul.f32 %v153, %v158
  %v161 = vld [vmem:[%s3] sm:$0x3]
  %v163 = vlaneseq
  %v164 = vshrl.u32 %v163, 7
  %v165 = vsub.s32 0, %v164
  %v166 = vrot.slane %v161, %v165
  %v167 = vlaneseq
  %v168 = vshrl.u32 %v167, 7
  %v169 = vsub.s32 1, %v168
  %v170 = vrot.slane %v161, %v169
  %v173 = vadd.f32 %v159, %v166
  %v174 = vadd.f32 %v160, %v170
  %v175 = vmax.f32 %v173, 0.0
  %v176 = vmax.f32 %v174, 0.0
  %177 = vst [vmem:[%s4] sm:$0xff] %v175
  %178 = vst [vmem:[%s4 + $0x8] sm:$0xff] %v176
  // Predicated region
  $region18: #{_lambda_.7} parent=0 // pred_check
    _
  $region19: #{_lambda_.7} parent=0 // pred_check_branch
    %180 = sbr.rel (0) target = $region21
  $region20: #{_lambda_.7} parent=0 // pred_region
    _
  $region21: #{_lambda_.7} parent=0 // pred_fallthru
    _
  // Predicated region
  $region22: #{_lambda_.7} parent=0 // pred_check
    _
  $region23: #{_lambda_.7} parent=0 // pred_check_branch
    %182 = sbr.rel (0) target = $region25
  $region24: #{_lambda_.7} parent=0 // pred_region
    _
  $region25: #{_lambda_.7} parent=0 // pred_fallthru
    _

// kernel: _lambda_.6
$region0: #{_lambda_.6}
  #allocation0 [shape = 'u32[]', space=smem, size = 0x4, offset = 0x4, fixed_abs, tag = 'smem constant byte address 0x4 - core index']
  #allocation1 [shape = 'u32[144,128]{1,0:T(1,128)}', space=vmem, size = 0x12000, scoped, tag = 'internal scratch']
  #allocation2 [shape = 'f32[1]{0:T(128)S(6)}', space=smem, size = 0x200, scoped, tag = 'scoped memory for _lambda_.6']
  %s0 = inlined_call_operand.<no memory space> [shape: f32[1], index: 0, kind: input, shape index: {}]
  %s1 = inlined_call_operand.vmem [shape: bf16[8,640], index: 1, kind: input, shape index: {}]
  %s2 = inlined_call_operand.vmem [shape: bf16[640,64], index: 2, kind: input, shape index: {}]
  %s3 = inlined_call_operand.vmem [shape: f32[1,64], index: 3, kind: input, shape index: {}]
  %s4 = inlined_call_operand.vmem [shape: bf16[8,64], index: 4, kind: output, shape index: {}]
  %s5 = sld [smem:[#allocation0]]
  $region26: #{_lambda_.6} parent=0
    _
  %s7 = ssub.s32 1, %s5
  %s8 = scalar_select 0, %s7, %s5
  %9 = sst [smem:[#allocation2]] %s0
  // Predicated region
  $region2: #{_lambda_.6} parent=0 // pred_check
    _
  $region3: #{_lambda_.6} parent=0 // pred_check_branch
    %11 = sbr.rel (0) target = $region5
  $region4: #{_lambda_.6} parent=0 // pred_region
    _
  $region5: #{_lambda_.6} parent=0 // pred_fallthru
    _
  // Predicated region
  $region6: #{_lambda_.6} parent=0 // pred_check
    _
  $region7: #{_lambda_.6} parent=0 // pred_check_branch
    %13 = sbr.rel (0) target = $region9
  $region8: #{_lambda_.6} parent=0 // pred_region
    _
  $region9: #{_lambda_.6} parent=0 // pred_fallthru
    _
  // Predicated region
  $region10: #{_lambda_.6} parent=0 // pred_check
    _
  $region11: #{_lambda_.6} parent=0 // pred_check_branch
    %15 = sbr.rel (0) target = $region13
  $region12: #{_lambda_.6} parent=0 // pred_region
    _
  $region13: #{_lambda_.6} parent=0 // pred_fallthru
    _
  // Predicated region
  $region14: #{_lambda_.6} parent=0 // pred_check
    _
  $region15: #{_lambda_.6} parent=0 // pred_check_branch
    %17 = sbr.rel (0) target = $region17
  $region16: #{_lambda_.6} parent=0 // pred_region
    _
  $region17: #{_lambda_.6} parent=0 // pred_fallthru
    _
  %v19 = vld [vmem:[%s1] sm:$0xff]
  %v20 = vld [vmem:[%s1 + $0x8] sm:$0xff]
  %v21 = vld [vmem:[%s1 + $0x10] sm:$0xf]
  %v22 = vld [vmem:[%s2] sm:$0xf]
  %v23 = vld [vmem:[%s2 + $0x4] sm:$0xf]
  %v24 = vld [vmem:[%s2 + $0x8] sm:$0xf]
  %v25 = vld [vmem:[%s2 + $0xc] sm:$0xf]
  %v26 = vld [vmem:[%s2 + $0x10] sm:$0xf]
  %v27 = vld [vmem:[%s2 + $0x14] sm:$0xf]
  %v28 = vld [vmem:[%s2 + $0x18] sm:$0xf]
  %v29 = vld [vmem:[%s2 + $0x1c] sm:$0xf]
  %v30 = vld [vmem:[%s2 + $0x20] sm:$0xf]
  %v31 = vld [vmem:[%s2 + $0x24] sm:$0xf]
  %v32 = vld [vmem:[%s2 + $0x28] sm:$0xf]
  %v33 = vld [vmem:[%s2 + $0x2c] sm:$0xf]
  %v34 = vld [vmem:[%s2 + $0x30] sm:$0xf]
  %v35 = vld [vmem:[%s2 + $0x34] sm:$0xf]
  %v36 = vld [vmem:[%s2 + $0x38] sm:$0xf]
  %v37 = vld [vmem:[%s2 + $0x3c] sm:$0xf]
  %v38 = vld [vmem:[%s2 + $0x40] sm:$0xf]
  %v39 = vld [vmem:[%s2 + $0x44] sm:$0xf]
  %v40 = vld [vmem:[%s2 + $0x48] sm:$0xf]
  %v41 = vld [vmem:[%s2 + $0x4c] sm:$0xf]
  %v42 = vld [vmem:[%s2 + $0x50] sm:$0xf]
  %v43 = vld [vmem:[%s2 + $0x54] sm:$0xf]
  %v44 = vld [vmem:[%s2 + $0x58] sm:$0xf]
  %v45 = vld [vmem:[%s2 + $0x5c] sm:$0xf]
  %v46 = vld [vmem:[%s2 + $0x60] sm:$0xf]
  %v47 = vld [vmem:[%s2 + $0x64] sm:$0xf]
  %v48 = vld [vmem:[%s2 + $0x68] sm:$0xf]
  %v49 = vld [vmem:[%s2 + $0x6c] sm:$0xf]
  %v50 = vld [vmem:[%s2 + $0x70] sm:$0xf]
  %v51 = vld [vmem:[%s2 + $0x74] sm:$0xf]
  %v52 = vld [vmem:[%s2 + $0x78] sm:$0xf]
  %v53 = vld [vmem:[%s2 + $0x7c] sm:$0xf]
  %v54 = vld [vmem:[%s2 + $0x80] sm:$0xf]
  %v55 = vld [vmem:[%s2 + $0x84] sm:$0xf]
  %v56 = vld [vmem:[%s2 + $0x88] sm:$0xf]
  %v57 = vld [vmem:[%s2 + $0x8c] sm:$0xf]
  %v58 = vld [vmem:[%s2 + $0x90] sm:$0xf]
  %v59 = vld [vmem:[%s2 + $0x94] sm:$0xf]
  %v60 = vld [vmem:[%s2 + $0x98] sm:$0xf]
  %v61 = vld [vmem:[%s2 + $0x9c] sm:$0xf]
  %v62 = vld [vmem:[%s2 + $0xa0] sm:$0xf]
  %v63 = vld [vmem:[%s2 + $0xa4] sm:$0xf]
  %v64 = vld [vmem:[%s2 + $0xa8] sm:$0xf]
  %v65 = vld [vmem:[%s2 + $0xac] sm:$0xf]
  %v66 = vld [vmem:[%s2 + $0xb0] sm:$0xf]
  %v67 = vld [vmem:[%s2 + $0xb4] sm:$0xf]
  %v68 = vld [vmem:[%s2 + $0xb8] sm:$0xf]
  %v69 = vld [vmem:[%s2 + $0xbc] sm:$0xf]
  %v70 = vld [vmem:[%s2 + $0xc0] sm:$0xf]
  %v71 = vld [vmem:[%s2 + $0xc4] sm:$0xf]
  %v72 = vld [vmem:[%s2 + $0xc8] sm:$0xf]
  %v73 = vld [vmem:[%s2 + $0xcc] sm:$0xf]
  %v74 = vld [vmem:[%s2 + $0xd0] sm:$0xf]
  %v75 = vld [vmem:[%s2 + $0xd4] sm:$0xf]
  %v76 = vld [vmem:[%s2 + $0xd8] sm:$0xf]
  %v77 = vld [vmem:[%s2 + $0xdc] sm:$0xf]
  %v78 = vld [vmem:[%s2 + $0xe0] sm:$0xf]
  %v79 = vld [vmem:[%s2 + $0xe4] sm:$0xf]
  %v80 = vld [vmem:[%s2 + $0xe8] sm:$0xf]
  %v81 = vld [vmem:[%s2 + $0xec] sm:$0xf]
  %v82 = vld [vmem:[%s2 + $0xf0] sm:$0xf]
  %v83 = vld [vmem:[%s2 + $0xf4] sm:$0xf]
  %v84 = vld [vmem:[%s2 + $0xf8] sm:$0xf]
  %v85 = vld [vmem:[%s2 + $0xfc] sm:$0xf]
  %v86 = vld [vmem:[%s2 + $0x100] sm:$0xf]
  %v87 = vld [vmem:[%s2 + $0x104] sm:$0xf]
  %v88 = vld [vmem:[%s2 + $0x108] sm:$0xf]
  %v89 = vld [vmem:[%s2 + $0x10c] sm:$0xf]
  %v90 = vld [vmem:[%s2 + $0x110] sm:$0xf]
  %v91 = vld [vmem:[%s2 + $0x114] sm:$0xf]
  %v92 = vld [vmem:[%s2 + $0x118] sm:$0xf]
  %v93 = vld [vmem:[%s2 + $0x11c] sm:$0xf]
  %v94 = vld [vmem:[%s2 + $0x120] sm:$0xf]
  %v95 = vld [vmem:[%s2 + $0x124] sm:$0xf]
  %v96 = vld [vmem:[%s2 + $0x128] sm:$0xf]
  %v97 = vld [vmem:[%s2 + $0x12c] sm:$0xf]
  %v98 = vld [vmem:[%s2 + $0x130] sm:$0xf]
  %v99 = vld [vmem:[%s2 + $0x134] sm:$0xf]
  %v100 = vld [vmem:[%s2 + $0x138] sm:$0xf]
  %v101 = vld [vmem:[%s2 + $0x13c] sm:$0xf]
  %v105 = vunpack.c.l.b16 %v19
  %v106 = vunpack.c.h.b16 %v19
  %v107 = vunpack.c.l.b16 %v20
  %v108 = vunpack.c.h.b16 %v20
  %v109 = vunpack.c.l.b16 %v21
  %v110 = vpack.c.b16 %v105, %v105
  %v111 = vpack.c.b16 %v106, %v106
  %v112 = vpack.c.b16 %v107, %v107
  %v113 = vpack.c.b16 %v108, %v108
  %v114 = vpack.c.b16 %v109, %v109
  %v200 = vunpack.c.l.b16 %v22
  %v201 = vunpack.c.l.b16 %v23
  %v202 = vunpack.c.l.b16 %v24
  %v203 = vunpack.c.l.b16 %v25
  %v204 = vunpack.c.l.b16 %v26
  %v205 = vunpack.c.l.b16 %v27
  %v206 = vunpack.c.l.b16 %v28
  %v207 = vunpack.c.l.b16 %v29
  %v208 = vunpack.c.l.b16 %v30
  %v209 = vunpack.c.l.b16 %v31
  %v210 = vunpack.c.l.b16 %v32
  %v211 = vunpack.c.l.b16 %v33
  %v212 = vunpack.c.l.b16 %v34
  %v213 = vunpack.c.l.b16 %v35
  %v214 = vunpack.c.l.b16 %v36
  %v215 = vunpack.c.l.b16 %v37
  %v216 = vunpack.c.l.b16 %v38
  %v217 = vunpack.c.l.b16 %v39
  %v218 = vunpack.c.l.b16 %v40
  %v219 = vunpack.c.l.b16 %v41
  %v220 = vunpack.c.l.b16 %v42
  %v221 = vunpack.c.l.b16 %v43
  %v222 = vunpack.c.l.b16 %v44
  %v223 = vunpack.c.l.b16 %v45
  %v224 = vunpack.c.l.b16 %v46
  %v225 = vunpack.c.l.b16 %v47
  %v226 = vunpack.c.l.b16 %v48
  %v227 = vunpack.c.l.b16 %v49
  %v228 = vunpack.c.l.b16 %v50
  %v229 = vunpack.c.l.b16 %v51
  %v230 = vunpack.c.l.b16 %v52
  %v231 = vunpack.c.l.b16 %v53
  %v232 = vunpack.c.l.b16 %v54
  %v233 = vunpack.c.l.b16 %v55
  %v234 = vunpack.c.l.b16 %v56
  %v235 = vunpack.c.l.b16 %v57
  %v236 = vunpack.c.l.b16 %v58
  %v237 = vunpack.c.l.b16 %v59
  %v238 = vunpack.c.l.b16 %v60
  %v239 = vunpack.c.l.b16 %v61
  %v240 = vunpack.c.l.b16 %v62
  %v241 = vunpack.c.l.b16 %v63
  %v242 = vunpack.c.l.b16 %v64
  %v243 = vunpack.c.l.b16 %v65
  %v244 = vunpack.c.l.b16 %v66
  %v245 = vunpack.c.l.b16 %v67
  %v246 = vunpack.c.l.b16 %v68
  %v247 = vunpack.c.l.b16 %v69
  %v248 = vunpack.c.l.b16 %v70
  %v249 = vunpack.c.l.b16 %v71
  %v250 = vunpack.c.l.b16 %v72
  %v251 = vunpack.c.l.b16 %v73
  %v252 = vunpack.c.l.b16 %v74
  %v253 = vunpack.c.l.b16 %v75
  %v254 = vunpack.c.l.b16 %v76
  %v255 = vunpack.c.l.b16 %v77
  %v256 = vunpack.c.l.b16 %v78
  %v257 = vunpack.c.l.b16 %v79
  %v258 = vunpack.c.l.b16 %v80
  %v259 = vunpack.c.l.b16 %v81
  %v260 = vunpack.c.l.b16 %v82
  %v261 = vunpack.c.l.b16 %v83
  %v262 = vunpack.c.l.b16 %v84
  %v263 = vunpack.c.l.b16 %v85
  %v264 = vunpack.c.l.b16 %v86
  %v265 = vunpack.c.l.b16 %v87
  %v266 = vunpack.c.l.b16 %v88
  %v267 = vunpack.c.l.b16 %v89
  %v268 = vunpack.c.l.b16 %v90
  %v269 = vunpack.c.l.b16 %v91
  %v270 = vunpack.c.l.b16 %v92
  %v271 = vunpack.c.l.b16 %v93
  %v272 = vunpack.c.l.b16 %v94
  %v273 = vunpack.c.l.b16 %v95
  %v274 = vunpack.c.l.b16 %v96
  %v275 = vunpack.c.l.b16 %v97
  %v276 = vunpack.c.l.b16 %v98
  %v277 = vunpack.c.l.b16 %v99
  %v278 = vunpack.c.l.b16 %v100
  %v279 = vunpack.c.l.b16 %v101
  %v280 = vpack.c.b16 %v201, %v200
  %v281 = vpack.c.b16 %v203, %v202
  %v282 = vpack.c.b16 %v205, %v204
  %v283 = vpack.c.b16 %v207, %v206
  %v284 = vpack.c.b16 %v209, %v208
  %v285 = vpack.c.b16 %v211, %v210
  %v286 = vpack.c.b16 %v213, %v212
  %v287 = vpack.c.b16 %v215, %v214
  %v288 = vpack.c.b16 %v217, %v216
  %v289 = vpack.c.b16 %v219, %v218
  %v290 = vpack.c.b16 %v221, %v220
  %v291 = vpack.c.b16 %v223, %v222
  %v292 = vpack.c.b16 %v225, %v224
  %v293 = vpack.c.b16 %v227, %v226
  %v294 = vpack.c.b16 %v229, %v228
  %v295 = vpack.c.b16 %v231, %v230
  %v296 = vpack.c.b16 %v233, %v232
  %v297 = vpack.c.b16 %v235, %v234
  %v298 = vpack.c.b16 %v237, %v236
  %v299 = vpack.c.b16 %v239, %v238
  %v300 = vpack.c.b16 %v241, %v240
  %v301 = vpack.c.b16 %v243, %v242
  %v302 = vpack.c.b16 %v245, %v244
  %v303 = vpack.c.b16 %v247, %v246
  %v304 = vpack.c.b16 %v249, %v248
  %v305 = vpack.c.b16 %v251, %v250
  %v306 = vpack.c.b16 %v253, %v252
  %v307 = vpack.c.b16 %v255, %v254
  %v308 = vpack.c.b16 %v257, %v256
  %v309 = vpack.c.b16 %v259, %v258
  %v310 = vpack.c.b16 %v261, %v260
  %v311 = vpack.c.b16 %v263, %v262
  %v312 = vpack.c.b16 %v265, %v264
  %v313 = vpack.c.b16 %v267, %v266
  %v314 = vpack.c.b16 %v269, %v268
  %v315 = vpack.c.b16 %v271, %v270
  %v316 = vpack.c.b16 %v273, %v272
  %v317 = vpack.c.b16 %v275, %v274
  %v318 = vpack.c.b16 %v277, %v276
  %v319 = vpack.c.b16 %v279, %v278
  %360 = vmatprep.subr.bf16.mxu0 0
  %361 = vmatpush1.bf16.msra.mxu0 %v287
  %362 = vmatprep.subr.bf16.mxu0 0
  %363 = vmatpush1.bf16.msra.mxu0 %v286
  %364 = vmatprep.subr.bf16.mxu0 0
  %365 = vmatpush1.bf16.msra.mxu0 %v285
  %366 = vmatprep.subr.bf16.mxu0 0
  %367 = vmatpush1.bf16.msra.mxu0 %v284
  %368 = vmatprep.subr.bf16.mxu0 0
  %369 = vmatpush1.bf16.msra.mxu0 %v283
  %370 = vmatprep.subr.bf16.mxu0 0
  %371 = vmatpush1.bf16.msra.mxu0 %v282
  %372 = vmatprep.subr.bf16.mxu0 0
  %373 = vmatpush1.bf16.msra.mxu0 %v281
  %374 = vmatprep.subr.bf16.mxu0 0
  %375 = vmatpush1.bf16.msra.mxu0 %v280
  %376 = vmatprep.subr.bf16.mxu0 0
  %377 = vmatpush2.bf16.msra.mxu0 %v295
  %378 = vmatprep.subr.bf16.mxu0 0
  %379 = vmatpush2.bf16.msra.mxu0 %v294
  %380 = vmatprep.subr.bf16.mxu0 0
  %381 = vmatpush2.bf16.msra.mxu0 %v293
  %382 = vmatprep.subr.bf16.mxu0 0
  %383 = vmatpush2.bf16.msra.mxu0 %v292
  %384 = vmatprep.subr.bf16.mxu0 0
  %385 = vmatpush2.bf16.msra.mxu0 %v291
  %386 = vmatprep.subr.bf16.mxu0 0
  %387 = vmatpush2.bf16.msra.mxu0 %v290
  %388 = vmatprep.subr.bf16.mxu0 0
  %389 = vmatpush2.bf16.msra.mxu0 %v289
  %390 = vmatprep.subr.bf16.mxu0 0
  %391 = vmatpush2.bf16.msra.mxu0 %v288
  %392 = vmatprep.mubr.bf16.mxu0 %v111
  %393 = vmatmul.mubr.bf16.gmra.mxu0 %v110
  %v394 = vpop.f32.mrf.mxu0
  %v395 = vadd.f32 0.0, %v394
  %v396 = vpop.f32.mrf.mxu0
  %v397 = vpop.f32.mrf.mxu0
  %v398 = vpop.f32.mrf.mxu0
  %399 = vdwg.mxu0
  %400 = vmatprep.subr.bf16.mxu0 0
  %401 = vmatpush1.bf16.msra.mxu0 %v303
  %402 = vmatprep.subr.bf16.mxu0 0
  %403 = vmatpush1.bf16.msra.mxu0 %v302
  %404 = vmatprep.subr.bf16.mxu0 0
  %405 = vmatpush1.bf16.msra.mxu0 %v301
  %406 = vmatprep.subr.bf16.mxu0 0
  %407 = vmatpush1.bf16.msra.mxu0 %v300
  %408 = vmatprep.subr.bf16.mxu0 0
  %409 = vmatpush1.bf16.msra.mxu0 %v299
  %410 = vmatprep.subr.bf16.mxu0 0
  %411 = vmatpush1.bf16.msra.mxu0 %v298
  %412 = vmatprep.subr.bf16.mxu0 0
  %413 = vmatpush1.bf16.msra.mxu0 %v297
  %414 = vmatprep.subr.bf16.mxu0 0
  %415 = vmatpush1.bf16.msra.mxu0 %v296
  %416 = vmatprep.subr.bf16.mxu0 0
  %417 = vmatpush2.bf16.msra.mxu0 %v311
  %418 = vmatprep.subr.bf16.mxu0 0
  %419 = vmatpush2.bf16.msra.mxu0 %v310
  %420 = vmatprep.subr.bf16.mxu0 0
  %421 = vmatpush2.bf16.msra.mxu0 %v309
  %422 = vmatprep.subr.bf16.mxu0 0
  %423 = vmatpush2.bf16.msra.mxu0 %v308
  %424 = vmatprep.subr.bf16.mxu0 0
  %425 = vmatpush2.bf16.msra.mxu0 %v307
  %426 = vmatprep.subr.bf16.mxu0 0
  %427 = vmatpush2.bf16.msra.mxu0 %v306
  %428 = vmatprep.subr.bf16.mxu0 0
  %429 = vmatpush2.bf16.msra.mxu0 %v305
  %430 = vmatprep.subr.bf16.mxu0 0
  %431 = vmatpush2.bf16.msra.mxu0 %v304
  %432 = vmatprep.mubr.bf16.mxu0 %v113
  %433 = vmatmul.mubr.bf16.gmra.mxu0 %v112
  %v434 = vpop.f32.mrf.mxu0
  %v435 = vadd.f32 %v395, %v434
  %v436 = vpop.f32.mrf.mxu0
  %v437 = vpop.f32.mrf.mxu0
  %v438 = vpop.f32.mrf.mxu0
  %439 = vdwg.mxu0
  %440 = vmatprep.subr.bf16.mxu0 0
  %441 = vmatpush1.bf16.msra.mxu0 %v319
  %442 = vmatprep.subr.bf16.mxu0 0
  %443 = vmatpush1.bf16.msra.mxu0 %v318
  %444 = vmatprep.subr.bf16.mxu0 0
  %445 = vmatpush1.bf16.msra.mxu0 %v317
  %446 = vmatprep.subr.bf16.mxu0 0
  %447 = vmatpush1.bf16.msra.mxu0 %v316
  %448 = vmatprep.subr.bf16.mxu0 0
  %449 = vmatpush1.bf16.msra.mxu0 %v315
  %450 = vmatprep.subr.bf16.mxu0 0
  %451 = vmatpush1.bf16.msra.mxu0 %v314
  %452 = vmatprep.subr.bf16.mxu0 0
  %453 = vmatpush1.bf16.msra.mxu0 %v313
  %454 = vmatprep.subr.bf16.mxu0 0
  %455 = vmatpush1.bf16.msra.mxu0 %v312
  %456 = vmatprep.subr.bf16.mxu0 0
  %457 = vmatpush2.bf16.msra.mxu0 0
  %458 = vmatprep.subr.bf16.mxu0 0
  %459 = vmatpush2.bf16.msra.mxu0 0
  %460 = vmatprep.subr.bf16.mxu0 0
  %461 = vmatpush2.bf16.msra.mxu0 0
  %462 = vmatprep.subr.bf16.mxu0 0
  %463 = vmatpush2.bf16.msra.mxu0 0
  %464 = vmatprep.subr.bf16.mxu0 0
  %465 = vmatpush2.bf16.msra.mxu0 0
  %466 = vmatprep.subr.bf16.mxu0 0
  %467 = vmatpush2.bf16.msra.mxu0 0
  %468 = vmatprep.subr.bf16.mxu0 0
  %469 = vmatpush2.bf16.msra.mxu0 0
  %470 = vmatprep.subr.bf16.mxu0 0
  %471 = vmatpush2.bf16.msra.mxu0 0
  %472 = vmatprep.mubr.bf16.mxu0 0
  %473 = vmatmul.mubr.bf16.gmra.mxu0 %v114
  %v474 = vpop.f32.mrf.mxu0
  %v475 = vadd.f32 %v435, %v474
  %v476 = vpop.f32.mrf.mxu0
  %v477 = vpop.f32.mrf.mxu0
  %v478 = vpop.f32.mrf.mxu0
  %479 = vdwg.mxu0
  %s480 = sld [smem:[#allocation2]]
  %v481 = vstv %s480
  %v482 = vmul.f32 %v475, %v481
  %v483 = vld [vmem:[%s3] sm:$0x1]
  %v485 = vlaneseq
  %v486 = vshrl.u32 %v485, 7
  %v487 = vsub.s32 0, %v486
  %v488 = vrot.slane %v483, %v487
  %v490 = vadd.f32 %v482, %v488
  %v491 = vmax.f32 %v490, 0.0
  %v492 = vpack.c.bf16 %v491, %v491
  %vm493 = vcmask 519168
  %494 = vst.msk [vmem:[%s4] sm:$0xf] %vm493, %v492
  // Predicated region
  $region18: #{_lambda_.6} parent=0 // pred_check
    _
  $region19: #{_lambda_.6} parent=0 // pred_check_branch
    %496 = sbr.rel (0) target = $region21
  $region20: #{_lambda_.6} parent=0 // pred_region
    _
  $region21: #{_lambda_.6} parent=0 // pred_fallthru
    _
  // Predicated region
  $region22: #{_lambda_.6} parent=0 // pred_check
    _
  $region23: #{_lambda_.6} parent=0 // pred_check_branch
    %498 = sbr.rel (0) target = $region25
  $region24: #{_lambda_.6} parent=0 // pred_region
    _
  $region25: #{_lambda_.6} parent=0 // pred_fallthru
    _

</llo_original>
